<compile_context>
chip_gen: v5e
topology: v5e:2x2
jax: 0.10.0
libtpu: 0.0.40
codegen_flags: <defaults>
</compile_context>

<pallas_src>
import functools

import jax
import jax.numpy as jnp
from jax.experimental import pallas as pl
from jax.experimental.pallas import tpu as pltpu


def _round_up(x, m):
    return ((x + m - 1) // m) * m


def _cdiv(a, b):
    return (a + b - 1) // b


def _vmem_capacity_bytes():
    """Per-core physical VMEM, generation-aware; conservative fallback."""
    try:
        info = pltpu.get_tpu_info()
        cap = int(getattr(info, "vmem_capacity_bytes", 0))
        if cap > 0:
            return cap
    except Exception:
        pass
    return 64 << 20  # smallest across v5e/v6e/v7x (v7x per-TC)


# -----------------------------------------------------------------------------
# Fused multi-layer kernel: for one row tile, apply every
# (Linear(+bias) -> Dropout(eval: identity) -> ReLU?) layer back to back.
# Weights/biases are per-layer padded, VMEM-resident refs (constant index_map).
# TODO(synk): training-mode dropout (pltpu.prng_seed/prng_random_bits per tile)
#             is not implemented; this kernel is eval-mode (dropout = identity).
# -----------------------------------------------------------------------------
def _fused_mlp_kernel(x_ref, *refs, relu_flags, compute_dtype):
    *wb_refs, o_ref = refs
    num_layers = len(relu_flags)
    h = x_ref[...].astype(compute_dtype)
    for l, apply_relu in enumerate(relu_flags):
        w_ref = wb_refs[2 * l]        # (din_pad_l, dout_pad_l), compute_dtype
        b_ref = wb_refs[2 * l + 1]    # (1, dout_pad_l), float32
        acc = jnp.dot(h, w_ref[...], preferred_element_type=jnp.float32)
        acc = acc + b_ref[...]        # f32 bias, broadcasts over rows
        if apply_relu:
            acc = jnp.maximum(acc, 0.0)
        h = acc.astype(compute_dtype) if l + 1 < num_layers else acc
    o_ref[...] = h.astype(o_ref.dtype)


def general_multilayer_forward(params, x, *, final_act=True, tm=None,
                               compute_dtype=jnp.bfloat16):
    """Fused GeneralMultiLayer forward.

    params: list of (w [d_in, d_out], b [1, d_out]) per layer.
    x: [M, d_in]. Returns [M, d_out_final] in x.dtype.
    """
    M, d_in = x.shape
    L = len(params)
    assert L >= 1 and params[0][0].shape[0] == d_in
    for l in range(1, L):
        assert params[l][0].shape[0] == params[l - 1][0].shape[1]
    d_out_final = params[-1][0].shape[1]
    out_dtype = x.dtype

    # Per-layer lane-dense padded dims (no square D_max x D_max padding).
    dout_pads = [_round_up(w.shape[1], 128) for (w, _) in params]
    din_pads = [_round_up(d_in, 128)] + dout_pads[:-1]

    c_item = jnp.dtype(compute_dtype).itemsize
    x_item = jnp.dtype(x.dtype).itemsize
    o_item = jnp.dtype(out_dtype).itemsize

    # ---- generation-aware VMEM budget --------------------------------------
    vmem_cap = _vmem_capacity_bytes()
    vmem_budget = int(vmem_cap * 0.7)
    w_bytes = sum(din_pads[l] * dout_pads[l] for l in range(L)) * c_item
    b_bytes = sum(dout_pads) * 4
    weight_resident = 2 * (w_bytes + b_bytes)   # worst case: double-buffered consts
    max_pad = max(din_pads + dout_pads)
    per_row = (2 * din_pads[0] * x_item         # x tile, double-buffered
               + 2 * dout_pads[-1] * o_item     # out tile, double-buffered
               + max_pad * (4 + 4 + c_item))    # live f32 acc/h + compute-dtype copy
    avail = vmem_budget - weight_resident - (2 << 20)

    if L > 1 and avail < 8 * per_row:
        # Resident weight stack too large for this chip's VMEM: run layer-by-layer.
        # TODO(synk): true weight streaming (manual double-buffered make_async_copy
        #             over K/N tiles of each layer) instead of HBM round-trips.
        h = x
        for l, (w, b) in enumerate(params):
            act = final_act if l == L - 1 else True
            h = general_multilayer_forward([(w, b)], h, final_act=act, tm=tm,
                                           compute_dtype=compute_dtype)
        return h

    # ---- row tile: big (default 1024), fits VMEM, >=2 grid steps, minimal pad ----
    tm_target = 1024 if tm is None else max(8, int(tm))
    tm_fit = max(8, (max(avail, 8 * per_row) // per_row) // 8 * 8)
    tm_cap = max(8, min(tm_target, tm_fit, _round_up(_cdiv(M, 2), 8)))
    tm_cap = (tm_cap // 8) * 8
    n_tiles = max(1, _cdiv(M, tm_cap))
    tm_eff = _round_up(_cdiv(M, n_tiles), 8)
    M_pad = n_tiles * tm_eff

    # ---- pad inputs only when needed ---------------------------------------
    if (M_pad != M) or (din_pads[0] != d_in):
        x_in = jnp.pad(x, ((0, M_pad - M), (0, din_pads[0] - d_in)))
    else:
        x_in = x

    wb_flat = []
    for l, (w, b) in enumerate(params):
        w_p = jnp.pad(w, ((0, din_pads[l] - w.shape[0]),
                          (0, dout_pads[l] - w.shape[1]))).astype(compute_dtype)
        b_p = jnp.pad(b.reshape(1, -1).astype(jnp.float32),
                      ((0, 0), (0, dout_pads[l] - b.shape[-1])))
        wb_flat += [w_p, b_p]

    relu_flags = tuple([True] * (L - 1) + [bool(final_act)])
    kernel = functools.partial(_fused_mlp_kernel, relu_flags=relu_flags,
                               compute_dtype=compute_dtype)

    bytes_needed = weight_resident + tm_eff * per_row + (2 << 20)
    vmem_limit = int(min(int(vmem_cap * 0.9),
                         max(bytes_needed * 5 // 4, 16 << 20)))

    def _call(single_buffer_consts):
        const_kwargs = ({"pipeline_mode": pl.Buffered(1)}
                        if single_buffer_consts else {})
        in_specs = [pl.BlockSpec((tm_eff, din_pads[0]), lambda i: (i, 0))]
        for l in range(L):
            in_specs.append(pl.BlockSpec((din_pads[l], dout_pads[l]),
                                         lambda i: (0, 0), **const_kwargs))
            in_specs.append(pl.BlockSpec((1, dout_pads[l]),
                                         lambda i: (0, 0), **const_kwargs))
        return pl.pallas_call(
            kernel,
            out_shape=jax.ShapeDtypeStruct((M_pad, dout_pads[-1]), out_dtype),
            grid_spec=pltpu.PrefetchScalarGridSpec(
                num_scalar_prefetch=0,
                grid=(M_pad // tm_eff,),
                in_specs=in_specs,
                out_specs=pl.BlockSpec((tm_eff, dout_pads[-1]), lambda i: (i, 0)),
            ),
            compiler_params=pltpu.CompilerParams(
                dimension_semantics=("parallel",),   # shards row tiles across TCs
                vmem_limit_bytes=vmem_limit,
            ),
        )(x_in, *wb_flat)

    try:
        # Constant-index weight/bias blocks need no double buffer.
        out_pad = _call(True)
    except Exception:
        # pipeline_mode=pl.Buffered(1) unsupported on this jax version: default buffering.
        out_pad = _call(False)

    if M_pad == M and dout_pads[-1] == d_out_final:
        return out_pad
    return out_pad[:M, :d_out_final]


# -----------------------------------------------------------------------------
# Parameter init mimicking nn.Linear's uniform init (deterministic), and a pure
# JAX reference for correctness checks.
# -----------------------------------------------------------------------------
def init_general_multilayer(key, num_layers, dim_in, dim_out, dim_inner=None,
                            dtype=jnp.float32):
    dim_inner = dim_in if dim_inner is None else dim_inner
    params = []
    for i in range(num_layers):
        d_in = dim_in if i == 0 else dim_inner
        d_out = dim_out if i == num_layers - 1 else dim_inner
        key, kw, kb = jax.random.split(key, 3)
        bound = 1.0 / (d_in ** 0.5)
        w = jax.random.uniform(kw, (d_in, d_out), dtype, -bound, bound)
        b = jax.random.uniform(kb, (1, d_out), dtype, -bound, bound)
        params.append((w, b))
    return params


def _reference_forward(params, x, *, final_act=True):
    L = len(params)
    h = x
    for i, (w, b) in enumerate(params):
        has_act = final_act if i == L - 1 else True
        h = jnp.dot(h, w, precision=jax.lax.Precision.HIGHEST) + b
        if has_act:
            h = jnp.maximum(h, 0.0)
    return h


if __name__ == "__main__":
    key = jax.random.PRNGKey(0)
    k_p1, k_x1, k_x2, k_p3, k_x3 = jax.random.split(key, 5)

    # --- Test 1: default bf16 MXU path --------------------------------------
    num_layers, dim_in, dim_inner, dim_out = 3, 16, 32, 32
    n_nodes = 64
    params = init_general_multilayer(k_p1, num_layers, dim_in, dim_out,
                                     dim_inner=dim_inner)
    x = jax.random.normal(k_x1, (n_nodes, dim_in), jnp.float32)
    out = jax.block_until_ready(
        general_multilayer_forward(params, x, final_act=True))
    ref = _reference_forward(params, x, final_act=True)
    assert out.shape == (n_nodes, dim_out)
    assert jnp.allclose(out, ref, atol=3e-2, rtol=3e-2), \
        float(jnp.max(jnp.abs(out - ref)))

    # --- Test 2: f32 compute, ragged rows, final_act=False, explicit tm -----
    x2 = jax.random.normal(k_x2, (70, dim_in), jnp.float32)
    out2 = jax.block_until_ready(
        general_multilayer_forward(params, x2, final_act=False, tm=32,
                                   compute_dtype=jnp.float32))
    ref2 = _reference_forward(params, x2, final_act=False)
    assert out2.shape == (70, dim_out)
    assert jnp.allclose(out2, ref2, atol=1e-2, rtol=1e-2), \
        float(jnp.max(jnp.abs(out2 - ref2)))

    # --- Test 3: asymmetric layer widths (exercises per-layer padding) ------
    params3 = init_general_multilayer(k_p3, 2, 16, 40, dim_inner=200)
    x3 = jax.random.normal(k_x3, (50, 16), jnp.float32)
    out3 = jax.block_until_ready(
        general_multilayer_forward(params3, x3, final_act=True,
                                   compute_dtype=jnp.float32))
    ref3 = _reference_forward(params3, x3, final_act=True)
    assert out3.shape == (50, 40)
    assert jnp.allclose(out3, ref3, atol=1e-2, rtol=1e-2), \
        float(jnp.max(jnp.abs(out3 - ref3)))

    print("KERNEL_OK")
</pallas_src>

<mosaic_0001>
module attributes {stable_mosaic.version = 11 : i64} {
  func.func @_fused_mlp_kernel(%arg0: i32, %arg1: memref<32x128xf32, #tpu.memory_space<vmem>>, %arg2: memref<128x128xbf16, #tpu.memory_space<vmem>>, %arg3: memref<1x128xf32, #tpu.memory_space<vmem>>, %arg4: memref<128x128xbf16, #tpu.memory_space<vmem>>, %arg5: memref<1x128xf32, #tpu.memory_space<vmem>>, %arg6: memref<128x128xbf16, #tpu.memory_space<vmem>>, %arg7: memref<1x128xf32, #tpu.memory_space<vmem>>, %arg8: memref<32x128xf32, #tpu.memory_space<vmem>>) attributes {dimension_semantics = [#tpu.dimension_semantics<parallel>], iteration_bounds = array<i64: 2>, scalar_prefetch = 0 : i64, scratch_operands = 0 : i64, tpu.core_type = #tpu.core_type<tc>, window_params = [{transform_indices = @transform_0, window_bounds = array<i64: 32, 128>}, {pipeline_mode = #tpu.pipeline_mode<synchronous>, transform_indices = @transform_1, window_bounds = array<i64: 128, 128>}, {pipeline_mode = #tpu.pipeline_mode<synchronous>, transform_indices = @transform_2, window_bounds = array<i64: 1, 128>}, {pipeline_mode = #tpu.pipeline_mode<synchronous>, transform_indices = @transform_3, window_bounds = array<i64: 128, 128>}, {pipeline_mode = #tpu.pipeline_mode<synchronous>, transform_indices = @transform_4, window_bounds = array<i64: 1, 128>}, {pipeline_mode = #tpu.pipeline_mode<synchronous>, transform_indices = @transform_5, window_bounds = array<i64: 128, 128>}, {pipeline_mode = #tpu.pipeline_mode<synchronous>, transform_indices = @transform_6, window_bounds = array<i64: 1, 128>}, {transform_indices = @transform_7, window_bounds = array<i64: 32, 128>}]} {
    %c0 = arith.constant 0 : index
    %c0_0 = arith.constant 0 : index
    %0 = vector.load %arg1[%c0, %c0_0] : memref<32x128xf32, #tpu.memory_space<vmem>>, vector<32x128xf32>
    %1 = arith.truncf %0 : vector<32x128xf32> to vector<32x128xbf16>
    %c0_1 = arith.constant 0 : index
    %c0_2 = arith.constant 0 : index
    %2 = vector.load %arg2[%c0_1, %c0_2] : memref<128x128xbf16, #tpu.memory_space<vmem>>, vector<128x128xbf16>
    %cst = arith.constant dense<0.000000e+00> : vector<32x128xf32>
    %3 = tpu.matmul %1, %2, %cst {dimension_numbers = #tpu.dot_dimension_numbers<[1], [0], [0], [1], [0, 0, 1, 1], [], []>} : vector<32x128xbf16>, vector<128x128xbf16>, vector<32x128xf32> -> vector<32x128xf32>
    %c0_3 = arith.constant 0 : index
    %c0_4 = arith.constant 0 : index
    %4 = vector.load %arg3[%c0_3, %c0_4] : memref<1x128xf32, #tpu.memory_space<vmem>>, vector<1x128xf32>
    %5 = vector.broadcast %4 : vector<1x128xf32> to vector<32x128xf32>
    %6 = arith.addf %3, %5 : vector<32x128xf32>
    %cst_5 = arith.constant 0.000000e+00 : f32
    %7 = vector.broadcast %cst_5 : f32 to vector<32x128xf32>
    %8 = arith.maximumf %6, %7 : vector<32x128xf32>
    %9 = arith.truncf %8 : vector<32x128xf32> to vector<32x128xbf16>
    %c0_6 = arith.constant 0 : index
    %c0_7 = arith.constant 0 : index
    %10 = vector.load %arg4[%c0_6, %c0_7] : memref<128x128xbf16, #tpu.memory_space<vmem>>, vector<128x128xbf16>
    %cst_8 = arith.constant dense<0.000000e+00> : vector<32x128xf32>
    %11 = tpu.matmul %9, %10, %cst_8 {dimension_numbers = #tpu.dot_dimension_numbers<[1], [0], [0], [1], [0, 0, 1, 1], [], []>} : vector<32x128xbf16>, vector<128x128xbf16>, vector<32x128xf32> -> vector<32x128xf32>
    %c0_9 = arith.constant 0 : index
    %c0_10 = arith.constant 0 : index
    %12 = vector.load %arg5[%c0_9, %c0_10] : memref<1x128xf32, #tpu.memory_space<vmem>>, vector<1x128xf32>
    %13 = vector.broadcast %12 : vector<1x128xf32> to vector<32x128xf32>
    %14 = arith.addf %11, %13 : vector<32x128xf32>
    %cst_11 = arith.constant 0.000000e+00 : f32
    %15 = vector.broadcast %cst_11 : f32 to vector<32x128xf32>
    %16 = arith.maximumf %14, %15 : vector<32x128xf32>
    %17 = arith.truncf %16 : vector<32x128xf32> to vector<32x128xbf16>
    %c0_12 = arith.constant 0 : index
    %c0_13 = arith.constant 0 : index
    %18 = vector.load %arg6[%c0_12, %c0_13] : memref<128x128xbf16, #tpu.memory_space<vmem>>, vector<128x128xbf16>
    %cst_14 = arith.constant dense<0.000000e+00> : vector<32x128xf32>
    %19 = tpu.matmul %17, %18, %cst_14 {dimension_numbers = #tpu.dot_dimension_numbers<[1], [0], [0], [1], [0, 0, 1, 1], [], []>} : vector<32x128xbf16>, vector<128x128xbf16>, vector<32x128xf32> -> vector<32x128xf32>
    %c0_15 = arith.constant 0 : index
    %c0_16 = arith.constant 0 : index
    %20 = vector.load %arg7[%c0_15, %c0_16] : memref<1x128xf32, #tpu.memory_space<vmem>>, vector<1x128xf32>
    %21 = vector.broadcast %20 : vector<1x128xf32> to vector<32x128xf32>
    %22 = arith.addf %19, %21 : vector<32x128xf32>
    %cst_17 = arith.constant 0.000000e+00 : f32
    %23 = vector.broadcast %cst_17 : f32 to vector<32x128xf32>
    %24 = arith.maximumf %22, %23 : vector<32x128xf32>
    %c0_18 = arith.constant 0 : index
    %c0_19 = arith.constant 0 : index
    %25 = vector.load %arg8[%c0_18, %c0_19] : memref<32x128xf32, #tpu.memory_space<vmem>>, vector<32x128xf32>
    tpu.vector_store %arg8[%c0_18, %c0_19], %24 {strides = array<i32>} : memref<32x128xf32, #tpu.memory_space<vmem>>, vector<32x128xf32>,
    return
  }
  func.func @transform_0(%arg0: i32) -> (i32, i32) {
    %c0_i32 = arith.constant 0 : i32
    %c0_i32_0 = arith.constant 0 : i32
    return %arg0, %c0_i32 : i32, i32
  }
  func.func @transform_1(%arg0: i32) -> (i32, i32) {
    %c0_i32 = arith.constant 0 : i32
    %c0_i32_0 = arith.constant 0 : i32
    %c0_i32_1 = arith.constant 0 : i32
    return %c0_i32, %c0_i32_0 : i32, i32
  }
  func.func @transform_2(%arg0: i32) -> (i32, i32) {
    %c0_i32 = arith.constant 0 : i32
    %c0_i32_0 = arith.constant 0 : i32
    %c0_i32_1 = arith.constant 0 : i32
    return %c0_i32, %c0_i32_0 : i32, i32
  }
  func.func @transform_3(%arg0: i32) -> (i32, i32) {
    %c0_i32 = arith.constant 0 : i32
    %c0_i32_0 = arith.constant 0 : i32
    %c0_i32_1 = arith.constant 0 : i32
    return %c0_i32, %c0_i32_0 : i32, i32
  }
  func.func @transform_4(%arg0: i32) -> (i32, i32) {
    %c0_i32 = arith.constant 0 : i32
    %c0_i32_0 = arith.constant 0 : i32
    %c0_i32_1 = arith.constant 0 : i32
    return %c0_i32, %c0_i32_0 : i32, i32
  }
  func.func @transform_5(%arg0: i32) -> (i32, i32) {
    %c0_i32 = arith.constant 0 : i32
    %c0_i32_0 = arith.constant 0 : i32
    %c0_i32_1 = arith.constant 0 : i32
    return %c0_i32, %c0_i32_0 : i32, i32
  }
  func.func @transform_6(%arg0: i32) -> (i32, i32) {
    %c0_i32 = arith.constant 0 : i32
    %c0_i32_0 = arith.constant 0 : i32
    %c0_i32_1 = arith.constant 0 : i32
    return %c0_i32, %c0_i32_0 : i32, i32
  }
  func.func @transform_7(%arg0: i32) -> (i32, i32) {
    %c0_i32 = arith.constant 0 : i32
    %c0_i32_0 = arith.constant 0 : i32
    return %arg0, %c0_i32 : i32, i32
  }
}

module attributes {stable_mosaic.version = 11 : i64} {
  func.func @_fused_mlp_kernel(%arg0: i32, %arg1: memref<32x128xf32, #tpu.memory_space<vmem>>, %arg2: memref<128x128xbf16, #tpu.memory_space<vmem>>, %arg3: memref<1x128xf32, #tpu.memory_space<vmem>>, %arg4: memref<128x128xbf16, #tpu.memory_space<vmem>>, %arg5: memref<1x128xf32, #tpu.memory_space<vmem>>, %arg6: memref<128x128xbf16, #tpu.memory_space<vmem>>, %arg7: memref<1x128xf32, #tpu.memory_space<vmem>>, %arg8: memref<32x128xf32, #tpu.memory_space<vmem>>) attributes {dimension_semantics = [#tpu.dimension_semantics<parallel>], iteration_bounds = array<i64: 2>, scalar_prefetch = 0 : i64, scratch_operands = 0 : i64, tpu.core_type = #tpu.core_type<tc>, window_params = [{transform_indices = @transform_0, window_bounds = array<i64: 32, 128>}, {pipeline_mode = #tpu.pipeline_mode<synchronous>, transform_indices = @transform_1, window_bounds = array<i64: 128, 128>}, {pipeline_mode = #tpu.pipeline_mode<synchronous>, transform_indices = @transform_2, window_bounds = array<i64: 1, 128>}, {pipeline_mode = #tpu.pipeline_mode<synchronous>, transform_indices = @transform_3, window_bounds = array<i64: 128, 128>}, {pipeline_mode = #tpu.pipeline_mode<synchronous>, transform_indices = @transform_4, window_bounds = array<i64: 1, 128>}, {pipeline_mode = #tpu.pipeline_mode<synchronous>, transform_indices = @transform_5, window_bounds = array<i64: 128, 128>}, {pipeline_mode = #tpu.pipeline_mode<synchronous>, transform_indices = @transform_6, window_bounds = array<i64: 1, 128>}, {transform_indices = @transform_7, window_bounds = array<i64: 32, 128>}]} {
    %c0 = arith.constant 0 : index
    %c0_0 = arith.constant 0 : index
    %0 = vector.load %arg1[%c0, %c0_0] : memref<32x128xf32, #tpu.memory_space<vmem>>, vector<32x128xf32>
    %1 = arith.truncf %0 : vector<32x128xf32> to vector<32x128xbf16>
    %c0_1 = arith.constant 0 : index
    %c0_2 = arith.constant 0 : index
    %2 = vector.load %arg2[%c0_1, %c0_2] : memref<128x128xbf16, #tpu.memory_space<vmem>>, vector<128x128xbf16>
    %cst = arith.constant dense<0.000000e+00> : vector<32x128xf32>
    %3 = tpu.matmul %1, %2, %cst {dimension_numbers = #tpu.dot_dimension_numbers<[1], [0], [0], [1], [0, 0, 1, 1], [], []>} : vector<32x128xbf16>, vector<128x128xbf16>, vector<32x128xf32> -> vector<32x128xf32>
    %c0_3 = arith.constant 0 : index
    %c0_4 = arith.constant 0 : index
    %4 = vector.load %arg3[%c0_3, %c0_4] : memref<1x128xf32, #tpu.memory_space<vmem>>, vector<1x128xf32>
    %5 = vector.broadcast %4 : vector<1x128xf32> to vector<32x128xf32>
    %6 = arith.addf %3, %5 : vector<32x128xf32>
    %cst_5 = arith.constant 0.000000e+00 : f32
    %7 = vector.broadcast %cst_5 : f32 to vector<32x128xf32>
    %8 = arith.maximumf %6, %7 : vector<32x128xf32>
    %9 = arith.truncf %8 : vector<32x128xf32> to vector<32x128xbf16>
    %c0_6 = arith.constant 0 : index
    %c0_7 = arith.constant 0 : index
    %10 = vector.load %arg4[%c0_6, %c0_7] : memref<128x128xbf16, #tpu.memory_space<vmem>>, vector<128x128xbf16>
    %cst_8 = arith.constant dense<0.000000e+00> : vector<32x128xf32>
    %11 = tpu.matmul %9, %10, %cst_8 {dimension_numbers = #tpu.dot_dimension_numbers<[1], [0], [0], [1], [0, 0, 1, 1], [], []>} : vector<32x128xbf16>, vector<128x128xbf16>, vector<32x128xf32> -> vector<32x128xf32>
    %c0_9 = arith.constant 0 : index
    %c0_10 = arith.constant 0 : index
    %12 = vector.load %arg5[%c0_9, %c0_10] : memref<1x128xf32, #tpu.memory_space<vmem>>, vector<1x128xf32>
    %13 = vector.broadcast %12 : vector<1x128xf32> to vector<32x128xf32>
    %14 = arith.addf %11, %13 : vector<32x128xf32>
    %cst_11 = arith.constant 0.000000e+00 : f32
    %15 = vector.broadcast %cst_11 : f32 to vector<32x128xf32>
    %16 = arith.maximumf %14, %15 : vector<32x128xf32>
    %17 = arith.truncf %16 : vector<32x128xf32> to vector<32x128xbf16>
    %c0_12 = arith.constant 0 : index
    %c0_13 = arith.constant 0 : index
    %18 = vector.load %arg6[%c0_12, %c0_13] : memref<128x128xbf16, #tpu.memory_space<vmem>>, vector<128x128xbf16>
    %cst_14 = arith.constant dense<0.000000e+00> : vector<32x128xf32>
    %19 = tpu.matmul %17, %18, %cst_14 {dimension_numbers = #tpu.dot_dimension_numbers<[1], [0], [0], [1], [0, 0, 1, 1], [], []>} : vector<32x128xbf16>, vector<128x128xbf16>, vector<32x128xf32> -> vector<32x128xf32>
    %c0_15 = arith.constant 0 : index
    %c0_16 = arith.constant 0 : index
    %20 = vector.load %arg7[%c0_15, %c0_16] : memref<1x128xf32, #tpu.memory_space<vmem>>, vector<1x128xf32>
    %21 = vector.broadcast %20 : vector<1x128xf32> to vector<32x128xf32>
    %22 = arith.addf %19, %21 : vector<32x128xf32>
    %cst_17 = arith.constant 0.000000e+00 : f32
    %23 = vector.broadcast %cst_17 : f32 to vector<32x128xf32>
    %24 = arith.maximumf %22, %23 : vector<32x128xf32>
    %c0_18 = arith.constant 0 : index
    %c0_19 = arith.constant 0 : index
    %25 = vector.load %arg8[%c0_18, %c0_19] : memref<32x128xf32, #tpu.memory_space<vmem>>, vector<32x128xf32>
    tpu.vector_store %arg8[%c0_18, %c0_19], %24 {strides = array<i32>} : memref<32x128xf32, #tpu.memory_space<vmem>>, vector<32x128xf32>,
    return
  }
  func.func @transform_0(%arg0: i32) -> (i32, i32) {
    %c0_i32 = arith.constant 0 : i32
    %c0_i32_0 = arith.constant 0 : i32
    return %arg0, %c0_i32 : i32, i32
  }
  func.func @transform_1(%arg0: i32) -> (i32, i32) {
    %c0_i32 = arith.constant 0 : i32
    %c0_i32_0 = arith.constant 0 : i32
    %c0_i32_1 = arith.constant 0 : i32
    return %c0_i32, %c0_i32_0 : i32, i32
  }
  func.func @transform_2(%arg0: i32) -> (i32, i32) {
    %c0_i32 = arith.constant 0 : i32
    %c0_i32_0 = arith.constant 0 : i32
    %c0_i32_1 = arith.constant 0 : i32
    return %c0_i32, %c0_i32_0 : i32, i32
  }
  func.func @transform_3(%arg0: i32) -> (i32, i32) {
    %c0_i32 = arith.constant 0 : i32
    %c0_i32_0 = arith.constant 0 : i32
    %c0_i32_1 = arith.constant 0 : i32
    return %c0_i32, %c0_i32_0 : i32, i32
  }
  func.func @transform_4(%arg0: i32) -> (i32, i32) {
    %c0_i32 = arith.constant 0 : i32
    %c0_i32_0 = arith.constant 0 : i32
    %c0_i32_1 = arith.constant 0 : i32
    return %c0_i32, %c0_i32_0 : i32, i32
  }
  func.func @transform_5(%arg0: i32) -> (i32, i32) {
    %c0_i32 = arith.constant 0 : i32
    %c0_i32_0 = arith.constant 0 : i32
    %c0_i32_1 = arith.constant 0 : i32
    return %c0_i32, %c0_i32_0 : i32, i32
  }
  func.func @transform_6(%arg0: i32) -> (i32, i32) {
    %c0_i32 = arith.constant 0 : i32
    %c0_i32_0 = arith.constant 0 : i32
    %c0_i32_1 = arith.constant 0 : i32
    return %c0_i32, %c0_i32_0 : i32, i32
  }
  func.func @transform_7(%arg0: i32) -> (i32, i32) {
    %c0_i32 = arith.constant 0 : i32
    %c0_i32_0 = arith.constant 0 : i32
    return %arg0, %c0_i32 : i32, i32
  }
}

</mosaic_0001>

<llo_original>
// kernel: tpu_custom_call.1
$region0: #{tpu_custom_call.1}
  #allocation0 [shape = 'u32[]', space=smem, size = 0x4, offset = 0x4, fixed_abs, tag = 'smem constant byte address 0x4 - core index']
  #allocation1 [shape = 'u32[72,128]{1,0:T(1,128)}', space=vmem, size = 0x9000, scoped, tag = 'internal scratch']
  %s0 = inlined_call_operand.hbm [shape: f32[64,128], index: 0, kind: input, shape index: {}]
  %s1 = inlined_call_operand.hbm [shape: bf16[128,128], index: 1, kind: input, shape index: {}]
  %s2 = inlined_call_operand.vmem [shape: f32[1,128], index: 2, kind: input, shape index: {}]
  %s3 = inlined_call_operand.hbm [shape: bf16[128,128], index: 3, kind: input, shape index: {}]
  %s4 = inlined_call_operand.vmem [shape: f32[1,128], index: 4, kind: input, shape index: {}]
  %s5 = inlined_call_operand.hbm [shape: bf16[128,128], index: 5, kind: input, shape index: {}]
  %s6 = inlined_call_operand.vmem [shape: f32[1,128], index: 6, kind: input, shape index: {}]
  %s7 = inlined_call_operand.hbm [shape: f32[64,128], index: 7, kind: output, shape index: {}]
  %s8 = sld [smem:[#allocation0]]
  $region77: #{tpu_custom_call.1} parent=0
    _
  %s10 = ssub.s32 1, %s8
  %s11 = scalar_select 0, %s10, %s8
  $region1: #{tpu_custom_call.1} parent=0
    #allocation2 [shape = 'u8[32768]{0}', space=vmem, size = 0x8000, scoped, tag = 'input window, operand 0']
    #allocation3 [shape = 's32[2]{0}', space=sflag, size = 0x8, scoped, tag = 'scoped memory for tpu_custom_call.1']
    #allocation4 [shape = 's32[2]{0}', space=sflag, size = 0x8, scoped, tag = 'scoped memory for tpu_custom_call.1']
    #allocation5 [shape = 'u8[32768]{0}', space=vmem, size = 0x8000, scoped, tag = 'input window, operand 1, single buffered']
    #allocation6 [shape = 's32[1]{0}', space=sflag, size = 0x4, scoped, tag = 'scoped memory for tpu_custom_call.1']
    #allocation7 [shape = 'u8[32768]{0}', space=vmem, size = 0x8000, scoped, tag = 'input window, operand 3, single buffered']
    #allocation8 [shape = 'u8[32768]{0}', space=vmem, size = 0x8000, scoped, tag = 'input window, operand 5, single buffered']
    #allocation9 [shape = 's32[1]{0}', space=sflag, size = 0x4, scoped, tag = 'scoped memory for tpu_custom_call.1']
    #allocation10 [shape = 'u8[32768]{0}', space=vmem, size = 0x8000, scoped, tag = 'output window, operand 0']
    %12 = vsyncpa [#allocation3], 0
    %s13 = scalar_lea.sflag [#allocation3], 1
    %14 = vsyncpa %s13, 0
    %15 = vsyncpa [#allocation6], 0
    %16 = vsyncpa [#allocation9], 0
    %17 = vsyncpa [#allocation4], 0
    %s18 = scalar_lea.sflag [#allocation4], 1
    %19 = vsyncpa %s18, 0
    loop: start=0, step=1, limit=4
    $region2: #{tpu_custom_call.1} parent=1 // loop_pre_header
      _
    $region3: #{tpu_custom_call.1} parent=1 // loop_header
      %s21 = sphi 0, %s25
      %p22 = scmp.ge.s32.totalorder %s21, 4
      %s31 = sphi 0, %s33
      %s34 = sphi 0, %s31
      %s35 = sphi 0, %s34
      %s51 = sphi 0, %s35
      %s55 = sphi 0, %s55
      %s57 = sphi 0, %s55
      %s58 = sphi 0, %s57
      %s72 = sphi 0, %s58
      %s76 = sphi 0, %s76
      %s78 = sphi 0, %s76
      %s79 = sphi 0, %s78
      %s93 = sphi 0, %s79
      %s97 = sphi 0, %s97
      %s99 = sphi 0, %s97
      %s100 = sphi 0, %s99
      %s114 = sphi 0, %s100
      %s118 = sphi 0, %s118
      %s120 = sphi 0, %s118
      %s121 = sphi 0, %s120
      %s135 = sphi 0, %s121
      %s139 = sphi 0, %s139
      %s141 = sphi 0, %s139
      %s142 = sphi 0, %s141
      %s156 = sphi 0, %s142
      %s160 = sphi 0, %s160
      %s162 = sphi 0, %s160
      %s163 = sphi 0, %s162
      %s177 = sphi 0, %s163
      %s183 = sphi 0, %s185
      %s186 = sphi 0, %s183
      %s187 = sphi 0, %s186
      %s203 = sphi 0, %s187
    $region4: #{tpu_custom_call.1} parent=1 // loop_header_branch
      %24 = sbr.rel (%p22) target = $region8
    $region5: #{tpu_custom_call.1} parent=1 // loop_body
      %s26 = ssub.s32 %s21, 1
      %s27 = ssub.s32 %s21, 2
      %s28 = sadd.s32 %s21, 1
      %s29 = ssub.s32 %s21, %s28
      %p30 = scmp.eq.s32.totalorder %s29, 0
      %s32 = sadd.s32 %s31, 1
      %s33 = scalar_select %p30, %s31, %s32
      %p36 = pneg %p30
      %p37 = scmp.eq.s32.totalorder %s21, 1
      %p38 = por %p36, %p37
      %p39 = scmp.ne.s32.totalorder %s31, %s34
      %p40 = scmp.eq.s32.totalorder %s21, 0
      %p41 = por %p39, %p40
      %p42 = scmp.ne.s32.totalorder %s31, %s34
      %p43 = scmp.eq.s32.totalorder %s26, 1
      %p44 = por %p42, %p43
      %p45 = scmp.ne.s32.totalorder %s34, %s35
      %p46 = scmp.eq.s32.totalorder %s26, 0
      %p47 = por %p45, %p46
      %p48 = scmp.ne.s32.totalorder %s34, %s35
      %p49 = scmp.eq.s32.totalorder %s27, 1
      %p50 = por %p48, %p49
      %p52 = scmp.ne.s32.totalorder %s35, %s51
      %p53 = scmp.eq.s32.totalorder %s27, 0
      %p54 = por %p52, %p53
      %s56 = sadd.s32 %s55, 1
      %p59 = scmp.eq.s32.totalorder %s21, 1
      %p60 = scmp.ne.s32.totalorder %s55, %s57
      %p61 = scmp.eq.s32.totalorder %s21, 0
      %p62 = por %p60, %p61
      %p63 = scmp.ne.s32.totalorder %s55, %s57
      %p64 = scmp.eq.s32.totalorder %s26, 1
      %p65 = por %p63, %p64
      %p66 = scmp.ne.s32.totalorder %s57, %s58
      %p67 = scmp.eq.s32.totalorder %s26, 0
      %p68 = por %p66, %p67
      %p69 = scmp.ne.s32.totalorder %s57, %s58
      %p70 = scmp.eq.s32.totalorder %s27, 1
      %p71 = por %p69, %p70
      %p73 = scmp.ne.s32.totalorder %s58, %s72
      %p74 = scmp.eq.s32.totalorder %s27, 0
      %p75 = por %p73, %p74
      %s77 = sadd.s32 %s76, 1
      %p80 = scmp.eq.s32.totalorder %s21, 1
      %p81 = scmp.ne.s32.totalorder %s76, %s78
      %p82 = scmp.eq.s32.totalorder %s21, 0
      %p83 = por %p81, %p82
      %p84 = scmp.ne.s32.totalorder %s76, %s78
      %p85 = scmp.eq.s32.totalorder %s26, 1
      %p86 = por %p84, %p85
      %p87 = scmp.ne.s32.totalorder %s78, %s79
      %p88 = scmp.eq.s32.totalorder %s26, 0
      %p89 = por %p87, %p88
      %p90 = scmp.ne.s32.totalorder %s78, %s79
      %p91 = scmp.eq.s32.totalorder %s27, 1
      %p92 = por %p90, %p91
      %p94 = scmp.ne.s32.totalorder %s79, %s93
      %p95 = scmp.eq.s32.totalorder %s27, 0
      %p96 = por %p94, %p95
      %s98 = sadd.s32 %s97, 1
      %p101 = scmp.eq.s32.totalorder %s21, 1
      %p102 = scmp.ne.s32.totalorder %s97, %s99
      %p103 = scmp.eq.s32.totalorder %s21, 0
      %p104 = por %p102, %p103
      %p105 = scmp.ne.s32.totalorder %s97, %s99
      %p106 = scmp.eq.s32.totalorder %s26, 1
      %p107 = por %p105, %p106
      %p108 = scmp.ne.s32.totalorder %s99, %s100
      %p109 = scmp.eq.s32.totalorder %s26, 0
      %p110 = por %p108, %p109
      %p111 = scmp.ne.s32.totalorder %s99, %s100
      %p112 = scmp.eq.s32.totalorder %s27, 1
      %p113 = por %p111, %p112
      %p115 = scmp.ne.s32.totalorder %s100, %s114
      %p116 = scmp.eq.s32.totalorder %s27, 0
      %p117 = por %p115, %p116
      %s119 = sadd.s32 %s118, 1
      %p122 = scmp.eq.s32.totalorder %s21, 1
      %p123 = scmp.ne.s32.totalorder %s118, %s120
      %p124 = scmp.eq.s32.totalorder %s21, 0
      %p125 = por %p123, %p124
      %p126 = scmp.ne.s32.totalorder %s118, %s120
      %p127 = scmp.eq.s32.totalorder %s26, 1
      %p128 = por %p126, %p127
      %p129 = scmp.ne.s32.totalorder %s120, %s121
      %p130 = scmp.eq.s32.totalorder %s26, 0
      %p131 = por %p129, %p130
      %p132 = scmp.ne.s32.totalorder %s120, %s121
      %p133 = scmp.eq.s32.totalorder %s27, 1
      %p134 = por %p132, %p133
      %p136 = scmp.ne.s32.totalorder %s121, %s135
      %p137 = scmp.eq.s32.totalorder %s27, 0
      %p138 = por %p136, %p137
      %s140 = sadd.s32 %s139, 1
      %p143 = scmp.eq.s32.totalorder %s21, 1
      %p144 = scmp.ne.s32.totalorder %s139, %s141
      %p145 = scmp.eq.s32.totalorder %s21, 0
      %p146 = por %p144, %p145
      %p147 = scmp.ne.s32.totalorder %s139, %s141
      %p148 = scmp.eq.s32.totalorder %s26, 1
      %p149 = por %p147, %p148
      %p150 = scmp.ne.s32.totalorder %s141, %s142
      %p151 = scmp.eq.s32.totalorder %s26, 0
      %p152 = por %p150, %p151
      %p153 = scmp.ne.s32.totalorder %s141, %s142
      %p154 = scmp.eq.s32.totalorder %s27, 1
      %p155 = por %p153, %p154
      %p157 = scmp.ne.s32.totalorder %s142, %s156
      %p158 = scmp.eq.s32.totalorder %s27, 0
      %p159 = por %p157, %p158
      %s161 = sadd.s32 %s160, 1
      %p164 = scmp.eq.s32.totalorder %s21, 1
      %p165 = scmp.ne.s32.totalorder %s160, %s162
      %p166 = scmp.eq.s32.totalorder %s21, 0
      %p167 = por %p165, %p166
      %p168 = scmp.ne.s32.totalorder %s160, %s162
      %p169 = scmp.eq.s32.totalorder %s26, 1
      %p170 = por %p168, %p169
      %p171 = scmp.ne.s32.totalorder %s162, %s163
      %p172 = scmp.eq.s32.totalorder %s26, 0
      %p173 = por %p171, %p172
      %p174 = scmp.ne.s32.totalorder %s162, %s163
      %p175 = scmp.eq.s32.totalorder %s27, 1
      %p176 = por %p174, %p175
      %p178 = scmp.ne.s32.totalorder %s163, %s177
      %p179 = scmp.eq.s32.totalorder %s27, 0
      %p180 = por %p178, %p179
      %s181 = ssub.s32 %s21, %s28
      %p182 = scmp.eq.s32.totalorder %s181, 0
      %s184 = sadd.s32 %s183, 1
      %s185 = scalar_select %p182, %s183, %s184
      %p188 = pneg %p182
      %p189 = scmp.eq.s32.totalorder %s21, 1
      %p190 = por %p188, %p189
      %p191 = scmp.ne.s32.totalorder %s183, %s186
      %p192 = scmp.eq.s32.totalorder %s21, 0
      %p193 = por %p191, %p192
      %p194 = scmp.ne.s32.totalorder %s183, %s186
      %p195 = scmp.eq.s32.totalorder %s26, 1
      %p196 = por %p194, %p195
      %p197 = scmp.ne.s32.totalorder %s186, %s187
      %p198 = scmp.eq.s32.totalorder %s26, 0
      %p199 = por %p197, %p198
      %p200 = scmp.ne.s32.totalorder %s186, %s187
      %p201 = scmp.eq.s32.totalorder %s27, 1
      %p202 = por %p200, %p201
      %p204 = scmp.ne.s32.totalorder %s187, %s203
      %p205 = scmp.eq.s32.totalorder %s27, 0
      %p206 = por %p204, %p205
      %p207 = scmp.le.s32.totalorder 1, %s21
      %p208 = scmp.lt.s32.totalorder %s21, 3
      %p209 = pnand %p207, %p208
      %p210 = pneg %p209
      // Predicated region
      $region9: #{tpu_custom_call.1} parent=5 // pred_check
        _
      $region10: #{tpu_custom_call.1} parent=5 // pred_check_branch
        %212 = sbr.rel (%p209) target = $region12
      $region11: #{tpu_custom_call.1} parent=5 // pred_region
        %s213 = ssub.s32 %s21, 1
        // Predicated region
        $region13: #{tpu_custom_call.1} parent=11 // pred_check
          %p214 = pneg %p68
        $region14: #{tpu_custom_call.1} parent=11 // pred_check_branch
          %216 = sbr.rel (%p214) target = $region16
        $region15: #{tpu_custom_call.1} parent=11 // pred_region
          %218 = vsyncadd [#allocation6], 0
          %s219 = sshll.u32 %s1, 4
          %s220 = int_to_ptr.hbm [resolvable:$true] %s219
          %s221 = sshll.u32 [#allocation5], 4
          %s222 = int_to_ptr.vmem [resolvable:$true] %s221
          %227 = dma.hbm_to_vmem [thread:$0]  %s220, 1024, %s222, [#allocation6], 64, 64, 4
        $region16: #{tpu_custom_call.1} parent=11 // pred_fallthru
          _
        // Predicated region
        $region17: #{tpu_custom_call.1} parent=11 // pred_check
          %p228 = pneg %p89
        $region18: #{tpu_custom_call.1} parent=11 // pred_check_branch
          %230 = sbr.rel (%p228) target = $region20
        $region19: #{tpu_custom_call.1} parent=11 // pred_region
          _
        $region20: #{tpu_custom_call.1} parent=11 // pred_fallthru
          _
        // Predicated region
        $region21: #{tpu_custom_call.1} parent=11 // pred_check
          %p231 = pneg %p110
        $region22: #{tpu_custom_call.1} parent=11 // pred_check_branch
          %233 = sbr.rel (%p231) target = $region24
        $region23: #{tpu_custom_call.1} parent=11 // pred_region
          %235 = vsyncadd [#allocation6], 0
          %s236 = sshll.u32 %s3, 4
          %s237 = int_to_ptr.hbm [resolvable:$true] %s236
          %s238 = sshll.u32 [#allocation7], 4
          %s239 = int_to_ptr.vmem [resolvable:$true] %s238
          %244 = dma.hbm_to_vmem [thread:$0]  %s237, 1024, %s239, [#allocation6], 64, 64, 4
        $region24: #{tpu_custom_call.1} parent=11 // pred_fallthru
          _
        // Predicated region
        $region25: #{tpu_custom_call.1} parent=11 // pred_check
          %p245 = pneg %p131
        $region26: #{tpu_custom_call.1} parent=11 // pred_check_branch
          %247 = sbr.rel (%p245) target = $region28
        $region27: #{tpu_custom_call.1} parent=11 // pred_region
          _
        $region28: #{tpu_custom_call.1} parent=11 // pred_fallthru
          _
        // Predicated region
        $region29: #{tpu_custom_call.1} parent=11 // pred_check
          %p248 = pneg %p152
        $region30: #{tpu_custom_call.1} parent=11 // pred_check_branch
          %250 = sbr.rel (%p248) target = $region32
        $region31: #{tpu_custom_call.1} parent=11 // pred_region
          %252 = vsyncadd [#allocation9], 0
          %s253 = sshll.u32 %s5, 4
          %s254 = int_to_ptr.hbm [resolvable:$true] %s253
          %s255 = sshll.u32 [#allocation8], 4
          %s256 = int_to_ptr.vmem [resolvable:$true] %s255
          %261 = dma.hbm_to_vmem [thread:$0]  %s254, 1024, %s256, [#allocation9], 64, 64, 4
        $region32: #{tpu_custom_call.1} parent=11 // pred_fallthru
          _
        // Predicated region
        $region33: #{tpu_custom_call.1} parent=11 // pred_check
          %p262 = pneg %p173
        $region34: #{tpu_custom_call.1} parent=11 // pred_check_branch
          %264 = sbr.rel (%p262) target = $region36
        $region35: #{tpu_custom_call.1} parent=11 // pred_region
          _
        $region36: #{tpu_custom_call.1} parent=11 // pred_fallthru
          _
      $region12: #{tpu_custom_call.1} parent=5 // pred_fallthru
        _
      %p265 = scmp.lt.s32.totalorder %s21, 2
      // Predicated region
      $region37: #{tpu_custom_call.1} parent=5 // pred_check
        %p266 = pneg %p265
      $region38: #{tpu_custom_call.1} parent=5 // pred_check_branch
        %268 = sbr.rel (%p266) target = $region40
      $region39: #{tpu_custom_call.1} parent=5 // pred_region
        // Predicated region
        $region41: #{tpu_custom_call.1} parent=39 // pred_check
          %p269 = pneg %p41
        $region42: #{tpu_custom_call.1} parent=39 // pred_check_branch
          %271 = sbr.rel (%p269) target = $region44
        $region43: #{tpu_custom_call.1} parent=39 // pred_region
          %s272 = sand.u32 %s31, 1
          %s273 = scalar_lea.sflag [#allocation3], %s272
          %s274 = sand.u32 %s31, 1
          %s275 = smul.addr %s274, 32
          %s276 = scalar_lea.vmem [#allocation2], %s275
          %s277 = smul.u32 4, %s21
          %279 = vsyncadd %s273, 0
          %s280 = smul.addr %s277, 8
          %s281 = scalar_lea.hbm %s0, %s280
          %s282 = sshll.u32 %s281, 4
          %s283 = int_to_ptr.hbm [resolvable:$true] %s282
          %s284 = sshll.u32 %s276, 4
          %s285 = int_to_ptr.vmem [resolvable:$true] %s284
          %290 = dma.hbm_to_vmem [thread:$0]  %s283, 512, %s285, %s273, 128, 128, 8
        $region44: #{tpu_custom_call.1} parent=39 // pred_fallthru
          _
      $region40: #{tpu_custom_call.1} parent=5 // pred_fallthru
        _
      %p291 = scmp.le.s32.totalorder 1, %s21
      %p292 = scmp.lt.s32.totalorder %s21, 3
      %p293 = pnand %p291, %p292
      %p294 = pneg %p293
      // Predicated region
      $region45: #{tpu_custom_call.1} parent=5 // pred_check
        _
      $region46: #{tpu_custom_call.1} parent=5 // pred_check_branch
        %296 = sbr.rel (%p293) target = $region48
      $region47: #{tpu_custom_call.1} parent=5 // pred_region
        %s297 = ssub.s32 %s21, 1
        %s298 = sand.u32 %s34, 1
        %s299 = scalar_lea.sflag [#allocation3], %s298
        %s300 = sand.u32 %s34, 1
        %s301 = smul.addr %s300, 32
        %s302 = scalar_lea.vmem [#allocation2], %s301
        // Predicated region
        $region49: #{tpu_custom_call.1} parent=47 // pred_check
          %p303 = pneg %p47
        $region50: #{tpu_custom_call.1} parent=47 // pred_check_branch
          %305 = sbr.rel (%p303) target = $region52
        $region51: #{tpu_custom_call.1} parent=47 // pred_region
          %307 = dma.done %s299, 512
        $region52: #{tpu_custom_call.1} parent=47 // pred_fallthru
          _
        // Predicated region
        $region53: #{tpu_custom_call.1} parent=47 // pred_check
          %p308 = pneg %p68
        $region54: #{tpu_custom_call.1} parent=47 // pred_check_branch
          %310 = sbr.rel (%p308) target = $region56
        $region55: #{tpu_custom_call.1} parent=47 // pred_region
          %312 = dma.done [#allocation6], 1024
        $region56: #{tpu_custom_call.1} parent=47 // pred_fallthru
          _
        // Predicated region
        $region57: #{tpu_custom_call.1} parent=47 // pred_check
          %p313 = pneg %p110
        $region58: #{tpu_custom_call.1} parent=47 // pred_check_branch
          %315 = sbr.rel (%p313) target = $region60
        $region59: #{tpu_custom_call.1} parent=47 // pred_region
          %317 = dma.done [#allocation6], 1024
        $region60: #{tpu_custom_call.1} parent=47 // pred_fallthru
          _
        // Predicated region
        $region61: #{tpu_custom_call.1} parent=47 // pred_check
          %p318 = pneg %p152
        $region62: #{tpu_custom_call.1} parent=47 // pred_check_branch
          %320 = sbr.rel (%p318) target = $region64
        $region63: #{tpu_custom_call.1} parent=47 // pred_region
          %322 = dma.done [#allocation9], 1024
        $region64: #{tpu_custom_call.1} parent=47 // pred_fallthru
          _
        %s323 = sand.u32 %s34, 1
        %s324 = scalar_lea.sflag [#allocation3], %s323
        %s325 = sand.u32 %s34, 1
        %s326 = smul.addr %s325, 32
        %s327 = scalar_lea.vmem [#allocation2], %s326
        %p328 = pneg %p47
        %p329 = pneg %p44
        %p330 = pneg %p68
        %p331 = pneg %p65
        %p332 = pneg %p89
        %p333 = pneg %p86
        %p334 = pneg %p110
        %p335 = pneg %p107
        %p336 = pneg %p131
        %p337 = pneg %p128
        %p338 = pneg %p152
        %p339 = pneg %p149
        %p340 = pneg %p173
        %p341 = pneg %p170
        %p342 = pneg %p199
        %p343 = pneg %p196
        %s344 = sand.u32 %s186, 1
        %s345 = scalar_lea.sflag [#allocation4], %s344
        %s346 = sand.u32 %s186, 1
        %s347 = smul.addr %s346, 32
        %s348 = scalar_lea.vmem [#allocation10], %s347
        %s349 = smul.u32 4, %s26
        %s350 = smul.u32 4, %s26
        %v351 = vld [vmem:[%s302] sm:$0xff]
        %v352 = vld [vmem:[%s302 + $0x8] sm:$0xff]
        %v353 = vld [vmem:[%s302 + $0x10] sm:$0xff]
        %v354 = vld [vmem:[%s302 + $0x18] sm:$0xff]
        %v355 = vpack.c.bf16 %v352, %v351
        %v356 = vpack.c.bf16 %v354, %v353
        %v357 = vld [vmem:[#allocation5] sm:$0xf]
        %v358 = vld [vmem:[#allocation5 + $0x4] sm:$0xf]
        %v359 = vld [vmem:[#allocation5 + $0x8] sm:$0xf]
        %v360 = vld [vmem:[#allocation5 + $0xc] sm:$0xf]
        %v361 = vld [vmem:[#allocation5 + $0x10] sm:$0xf]
        %v362 = vld [vmem:[#allocation5 + $0x14] sm:$0xf]
        %v363 = vld [vmem:[#allocation5 + $0x18] sm:$0xf]
        %v364 = vld [vmem:[#allocation5 + $0x1c] sm:$0xf]
        %v365 = vld [vmem:[#allocation5 + $0x20] sm:$0xf]
        %v366 = vld [vmem:[#allocation5 + $0x24] sm:$0xf]
        %v367 = vld [vmem:[#allocation5 + $0x28] sm:$0xf]
        %v368 = vld [vmem:[#allocation5 + $0x2c] sm:$0xf]
        %v369 = vld [vmem:[#allocation5 + $0x30] sm:$0xf]
        %v370 = vld [vmem:[#allocation5 + $0x34] sm:$0xf]
        %v371 = vld [vmem:[#allocation5 + $0x38] sm:$0xf]
        %v372 = vld [vmem:[#allocation5 + $0x3c] sm:$0xf]
        %v373 = vld [vmem:[%s2] sm:$0x1]
        %v375 = vperm.slane %v373, 0
        %v393 = vunpack.c.l.b16 %v357
        %v394 = vunpack.c.l.b16 %v358
        %v395 = vunpack.c.l.b16 %v359
        %v396 = vunpack.c.l.b16 %v360
        %v397 = vunpack.c.l.b16 %v361
        %v398 = vunpack.c.l.b16 %v362
        %v399 = vunpack.c.l.b16 %v363
        %v400 = vunpack.c.l.b16 %v364
        %v401 = vunpack.c.l.b16 %v365
        %v402 = vunpack.c.l.b16 %v366
        %v403 = vunpack.c.l.b16 %v367
        %v404 = vunpack.c.l.b16 %v368
        %v405 = vunpack.c.l.b16 %v369
        %v406 = vunpack.c.l.b16 %v370
        %v407 = vunpack.c.l.b16 %v371
        %v408 = vunpack.c.l.b16 %v372
        %v409 = vpack.c.b16 %v394, %v393
        %v410 = vpack.c.b16 %v396, %v395
        %v411 = vpack.c.b16 %v398, %v397
        %v412 = vpack.c.b16 %v400, %v399
        %v413 = vpack.c.b16 %v402, %v401
        %v414 = vpack.c.b16 %v404, %v403
        %v415 = vpack.c.b16 %v406, %v405
        %v416 = vpack.c.b16 %v408, %v407
        %425 = vmatpush.bf16.msra.mxu0 %v416
        %426 = vmatpush.bf16.msra.mxu0 %v415
        %427 = vmatpush.bf16.msra.mxu0 %v414
        %428 = vmatpush.bf16.msra.mxu0 %v413
        %429 = vmatpush.bf16.msra.mxu0 %v412
        %430 = vmatpush.bf16.msra.mxu0 %v411
        %431 = vmatpush.bf16.msra.mxu0 %v410
        %432 = vmatpush.bf16.msra.mxu0 %v409
        %433 = vmatmul.bf16.gmra.mxu0 %v355
        %v434 = vpop.f32.mrf.mxu0
        %v435 = vadd.f32 %v375, %v434
        %v436 = vpop.f32.mrf.mxu0
        %v437 = vadd.f32 %v375, %v436
        %438 = vmatmul.bf16.gmra.mxu0 %v356
        %v439 = vpop.f32.mrf.mxu0
        %v440 = vadd.f32 %v375, %v439
        %v441 = vpop.f32.mrf.mxu0
        %v442 = vadd.f32 %v375, %v441
        %443 = vdwg.mxu0
        %v444 = vmax.f32 %v435, 0.0
        %v445 = vmax.f32 %v437, 0.0
        %v446 = vmax.f32 %v440, 0.0
        %v447 = vmax.f32 %v442, 0.0
        %v448 = vpack.c.bf16 %v445, %v444
        %v449 = vpack.c.bf16 %v447, %v446
        %v450 = vld [vmem:[#allocation7] sm:$0xf]
        %v451 = vld [vmem:[#allocation7 + $0x4] sm:$0xf]
        %v452 = vld [vmem:[#allocation7 + $0x8] sm:$0xf]
        %v453 = vld [vmem:[#allocation7 + $0xc] sm:$0xf]
        %v454 = vld [vmem:[#allocation7 + $0x10] sm:$0xf]
        %v455 = vld [vmem:[#allocation7 + $0x14] sm:$0xf]
        %v456 = vld [vmem:[#allocation7 + $0x18] sm:$0xf]
        %v457 = vld [vmem:[#allocation7 + $0x1c] sm:$0xf]
        %v458 = vld [vmem:[#allocation7 + $0x20] sm:$0xf]
        %v459 = vld [vmem:[#allocation7 + $0x24] sm:$0xf]
        %v460 = vld [vmem:[#allocation7 + $0x28] sm:$0xf]
        %v461 = vld [vmem:[#allocation7 + $0x2c] sm:$0xf]
        %v462 = vld [vmem:[#allocation7 + $0x30] sm:$0xf]
        %v463 = vld [vmem:[#allocation7 + $0x34] sm:$0xf]
        %v464 = vld [vmem:[#allocation7 + $0x38] sm:$0xf]
        %v465 = vld [vmem:[#allocation7 + $0x3c] sm:$0xf]
        %v466 = vld [vmem:[%s4] sm:$0x1]
        %v468 = vperm.slane %v466, 0
        %v486 = vunpack.c.l.b16 %v450
        %v487 = vunpack.c.l.b16 %v451
        %v488 = vunpack.c.l.b16 %v452
        %v489 = vunpack.c.l.b16 %v453
        %v490 = vunpack.c.l.b16 %v454
        %v491 = vunpack.c.l.b16 %v455
        %v492 = vunpack.c.l.b16 %v456
        %v493 = vunpack.c.l.b16 %v457
        %v494 = vunpack.c.l.b16 %v458
        %v495 = vunpack.c.l.b16 %v459
        %v496 = vunpack.c.l.b16 %v460
        %v497 = vunpack.c.l.b16 %v461
        %v498 = vunpack.c.l.b16 %v462
        %v499 = vunpack.c.l.b16 %v463
        %v500 = vunpack.c.l.b16 %v464
        %v501 = vunpack.c.l.b16 %v465
        %v502 = vpack.c.b16 %v487, %v486
        %v503 = vpack.c.b16 %v489, %v488
        %v504 = vpack.c.b16 %v491, %v490
        %v505 = vpack.c.b16 %v493, %v492
        %v506 = vpack.c.b16 %v495, %v494
        %v507 = vpack.c.b16 %v497, %v496
        %v508 = vpack.c.b16 %v499, %v498
        %v509 = vpack.c.b16 %v501, %v500
        %518 = vmatpush.bf16.msra.mxu0 %v509
        %519 = vmatpush.bf16.msra.mxu0 %v508
        %520 = vmatpush.bf16.msra.mxu0 %v507
        %521 = vmatpush.bf16.msra.mxu0 %v506
        %522 = vmatpush.bf16.msra.mxu0 %v505
        %523 = vmatpush.bf16.msra.mxu0 %v504
        %524 = vmatpush.bf16.msra.mxu0 %v503
        %525 = vmatpush.bf16.msra.mxu0 %v502
        %526 = vmatmul.bf16.gmra.mxu0 %v448
        %v527 = vpop.f32.mrf.mxu0
        %v528 = vadd.f32 %v468, %v527
        %v529 = vpop.f32.mrf.mxu0
        %v530 = vadd.f32 %v468, %v529
        %531 = vmatmul.bf16.gmra.mxu0 %v449
        %v532 = vpop.f32.mrf.mxu0
        %v533 = vadd.f32 %v468, %v532
        %v534 = vpop.f32.mrf.mxu0
        %v535 = vadd.f32 %v468, %v534
        %536 = vdwg.mxu0
        %v537 = vmax.f32 %v528, 0.0
        %v538 = vmax.f32 %v530, 0.0
        %v539 = vmax.f32 %v533, 0.0
        %v540 = vmax.f32 %v535, 0.0
        %v541 = vpack.c.bf16 %v538, %v537
        %v542 = vpack.c.bf16 %v540, %v539
        %v543 = vld [vmem:[#allocation8] sm:$0xf]
        %v544 = vld [vmem:[#allocation8 + $0x4] sm:$0xf]
        %v545 = vld [vmem:[#allocation8 + $0x8] sm:$0xf]
        %v546 = vld [vmem:[#allocation8 + $0xc] sm:$0xf]
        %v547 = vld [vmem:[#allocation8 + $0x10] sm:$0xf]
        %v548 = vld [vmem:[#allocation8 + $0x14] sm:$0xf]
        %v549 = vld [vmem:[#allocation8 + $0x18] sm:$0xf]
        %v550 = vld [vmem:[#allocation8 + $0x1c] sm:$0xf]
        %v551 = vld [vmem:[#allocation8 + $0x20] sm:$0xf]
        %v552 = vld [vmem:[#allocation8 + $0x24] sm:$0xf]
        %v553 = vld [vmem:[#allocation8 + $0x28] sm:$0xf]
        %v554 = vld [vmem:[#allocation8 + $0x2c] sm:$0xf]
        %v555 = vld [vmem:[#allocation8 + $0x30] sm:$0xf]
        %v556 = vld [vmem:[#allocation8 + $0x34] sm:$0xf]
        %v557 = vld [vmem:[#allocation8 + $0x38] sm:$0xf]
        %v558 = vld [vmem:[#allocation8 + $0x3c] sm:$0xf]
        %v559 = vld [vmem:[%s6] sm:$0x1]
        %v561 = vperm.slane %v559, 0
        %v579 = vunpack.c.l.b16 %v543
        %v580 = vunpack.c.l.b16 %v544
        %v581 = vunpack.c.l.b16 %v545
        %v582 = vunpack.c.l.b16 %v546
        %v583 = vunpack.c.l.b16 %v547
        %v584 = vunpack.c.l.b16 %v548
        %v585 = vunpack.c.l.b16 %v549
        %v586 = vunpack.c.l.b16 %v550
        %v587 = vunpack.c.l.b16 %v551
        %v588 = vunpack.c.l.b16 %v552
        %v589 = vunpack.c.l.b16 %v553
        %v590 = vunpack.c.l.b16 %v554
        %v591 = vunpack.c.l.b16 %v555
        %v592 = vunpack.c.l.b16 %v556
        %v593 = vunpack.c.l.b16 %v557
        %v594 = vunpack.c.l.b16 %v558
        %v595 = vpack.c.b16 %v580, %v579
        %v596 = vpack.c.b16 %v582, %v581
        %v597 = vpack.c.b16 %v584, %v583
        %v598 = vpack.c.b16 %v586, %v585
        %v599 = vpack.c.b16 %v588, %v587
        %v600 = vpack.c.b16 %v590, %v589
        %v601 = vpack.c.b16 %v592, %v591
        %v602 = vpack.c.b16 %v594, %v593
        %611 = vmatpush.bf16.msra.mxu0 %v602
        %612 = vmatpush.bf16.msra.mxu0 %v601
        %613 = vmatpush.bf16.msra.mxu0 %v600
        %614 = vmatpush.bf16.msra.mxu0 %v599
        %615 = vmatpush.bf16.msra.mxu0 %v598
        %616 = vmatpush.bf16.msra.mxu0 %v597
        %617 = vmatpush.bf16.msra.mxu0 %v596
        %618 = vmatpush.bf16.msra.mxu0 %v595
        %619 = vmatmul.bf16.gmra.mxu0 %v541
        %v620 = vpop.f32.mrf.mxu0
        %v621 = vadd.f32 %v561, %v620
        %v622 = vpop.f32.mrf.mxu0
        %v623 = vadd.f32 %v561, %v622
        %624 = vmatmul.bf16.gmra.mxu0 %v542
        %v625 = vpop.f32.mrf.mxu0
        %v626 = vadd.f32 %v561, %v625
        %v627 = vpop.f32.mrf.mxu0
        %v628 = vadd.f32 %v561, %v627
        %629 = vdwg.mxu0
        %v630 = vmax.f32 %v621, 0.0
        %v631 = vmax.f32 %v623, 0.0
        %v632 = vmax.f32 %v626, 0.0
        %v633 = vmax.f32 %v628, 0.0
        %634 = vst [vmem:[%s348] sm:$0xff] %v630
        %635 = vst [vmem:[%s348 + $0x8] sm:$0xff] %v631
        %636 = vst [vmem:[%s348 + $0x10] sm:$0xff] %v632
        %637 = vst [vmem:[%s348 + $0x18] sm:$0xff] %v633
        %s638 = sand.u32 %s186, 1
        %s639 = scalar_lea.sflag [#allocation4], %s638
        %s640 = sand.u32 %s186, 1
        %s641 = smul.addr %s640, 32
        %s642 = scalar_lea.vmem [#allocation10], %s641
        // Predicated region
        $region65: #{tpu_custom_call.1} parent=47 // pred_check
          %p643 = pneg %p196
        $region66: #{tpu_custom_call.1} parent=47 // pred_check_branch
          %645 = sbr.rel (%p643) target = $region68
        $region67: #{tpu_custom_call.1} parent=47 // pred_region
          %s646 = smul.u32 4, %s26
          %648 = vsyncadd %s639, 0
          %s649 = smul.addr %s646, 8
          %s650 = scalar_lea.hbm %s7, %s649
          %s651 = sshll.u32 %s642, 4
          %s652 = int_to_ptr.vmem [resolvable:$true] %s651
          %s653 = sshll.u32 %s650, 4
          %s654 = int_to_ptr.hbm [resolvable:$true] %s653
          %659 = dma.vmem_to_hbm [thread:$0]  %s652, 512, %s654, %s639, 128, 128, 8
        $region68: #{tpu_custom_call.1} parent=47 // pred_fallthru
          _
      $region48: #{tpu_custom_call.1} parent=5 // pred_fallthru
        _
      %p660 = scmp.le.s32.totalorder 2, %s21
      // Predicated region
      $region69: #{tpu_custom_call.1} parent=5 // pred_check
        %p661 = pneg %p660
      $region70: #{tpu_custom_call.1} parent=5 // pred_check_branch
        %663 = sbr.rel (%p661) target = $region72
      $region71: #{tpu_custom_call.1} parent=5 // pred_region
        %s664 = ssub.s32 %s21, 2
        // Predicated region
        $region73: #{tpu_custom_call.1} parent=71 // pred_check
          %p665 = pneg %p202
        $region74: #{tpu_custom_call.1} parent=71 // pred_check_branch
          %667 = sbr.rel (%p665) target = $region76
        $region75: #{tpu_custom_call.1} parent=71 // pred_region
          %s668 = sand.u32 %s187, 1
          %s669 = scalar_lea.sflag [#allocation4], %s668
          %s670 = sand.u32 %s187, 1
          %s671 = smul.addr %s670, 32
          %s672 = scalar_lea.vmem [#allocation10], %s671
          %674 = dma.done %s669, 512
        $region76: #{tpu_custom_call.1} parent=71 // pred_fallthru
          _
      $region72: #{tpu_custom_call.1} parent=5 // pred_fallthru
        _
    $region6: #{tpu_custom_call.1} parent=1 // loop_footer
      %s25 = sadd.s32 1, %s21
    $region7: #{tpu_custom_call.1} parent=1 // loop_footer_branch
      %20 = sbr.rel target = $region3
    $region8: #{tpu_custom_call.1} parent=1 // loop_exit
      _
    %675 = vsyncpa [#allocation3], 1
    %s676 = scalar_lea.sflag [#allocation3], 1
    %677 = vsyncpa %s676, 1
    %678 = vsyncpa [#allocation6], 1
    %679 = vsyncpa [#allocation9], 1
    %680 = vsyncpa [#allocation4], 1
    %s681 = scalar_lea.sflag [#allocation4], 1
    %682 = vsyncpa %s681, 1

// kernel: tpu_custom_call.1
$region0: #{tpu_custom_call.1}
  #allocation0 [shape = 'u32[]', space=smem, size = 0x4, offset = 0x4, fixed_abs, tag = 'smem constant byte address 0x4 - core index']
  #allocation1 [shape = 'u32[72,128]{1,0:T(1,128)}', space=vmem, size = 0x9000, scoped, tag = 'internal scratch']
  %s0 = inlined_call_operand.hbm [shape: f32[64,128], index: 0, kind: input, shape index: {}]
  %s1 = inlined_call_operand.hbm [shape: bf16[128,128], index: 1, kind: input, shape index: {}]
  %s2 = inlined_call_operand.vmem [shape: f32[1,128], index: 2, kind: input, shape index: {}]
  %s3 = inlined_call_operand.hbm [shape: bf16[128,128], index: 3, kind: input, shape index: {}]
  %s4 = inlined_call_operand.vmem [shape: f32[1,128], index: 4, kind: input, shape index: {}]
  %s5 = inlined_call_operand.hbm [shape: bf16[128,128], index: 5, kind: input, shape index: {}]
  %s6 = inlined_call_operand.vmem [shape: f32[1,128], index: 6, kind: input, shape index: {}]
  %s7 = inlined_call_operand.hbm [shape: f32[64,128], index: 7, kind: output, shape index: {}]
  %s8 = sld [smem:[#allocation0]]
  $region77: #{tpu_custom_call.1} parent=0
    _
  %s10 = ssub.s32 1, %s8
  %s11 = scalar_select 0, %s10, %s8
  $region1: #{tpu_custom_call.1} parent=0
    #allocation2 [shape = 'u8[32768]{0}', space=vmem, size = 0x8000, scoped, tag = 'input window, operand 0']
    #allocation3 [shape = 's32[2]{0}', space=sflag, size = 0x8, scoped, tag = 'scoped memory for tpu_custom_call.1']
    #allocation4 [shape = 's32[2]{0}', space=sflag, size = 0x8, scoped, tag = 'scoped memory for tpu_custom_call.1']
    #allocation5 [shape = 'u8[32768]{0}', space=vmem, size = 0x8000, scoped, tag = 'input window, operand 1, single buffered']
    #allocation6 [shape = 's32[1]{0}', space=sflag, size = 0x4, scoped, tag = 'scoped memory for tpu_custom_call.1']
    #allocation7 [shape = 'u8[32768]{0}', space=vmem, size = 0x8000, scoped, tag = 'input window, operand 3, single buffered']
    #allocation8 [shape = 'u8[32768]{0}', space=vmem, size = 0x8000, scoped, tag = 'input window, operand 5, single buffered']
    #allocation9 [shape = 's32[1]{0}', space=sflag, size = 0x4, scoped, tag = 'scoped memory for tpu_custom_call.1']
    #allocation10 [shape = 'u8[32768]{0}', space=vmem, size = 0x8000, scoped, tag = 'output window, operand 0']
    %12 = vsyncpa [#allocation3], 0
    %s13 = scalar_lea.sflag [#allocation3], 1
    %14 = vsyncpa %s13, 0
    %15 = vsyncpa [#allocation6], 0
    %16 = vsyncpa [#allocation9], 0
    %17 = vsyncpa [#allocation4], 0
    %s18 = scalar_lea.sflag [#allocation4], 1
    %19 = vsyncpa %s18, 0
    loop: start=0, step=1, limit=4
    $region2: #{tpu_custom_call.1} parent=1 // loop_pre_header
      _
    $region3: #{tpu_custom_call.1} parent=1 // loop_header
      %s21 = sphi 0, %s25
      %p22 = scmp.ge.s32.totalorder %s21, 4
      %s31 = sphi 0, %s33
      %s34 = sphi 0, %s31
      %s35 = sphi 0, %s34
      %s51 = sphi 0, %s35
      %s55 = sphi 0, %s55
      %s57 = sphi 0, %s55
      %s58 = sphi 0, %s57
      %s72 = sphi 0, %s58
      %s76 = sphi 0, %s76
      %s78 = sphi 0, %s76
      %s79 = sphi 0, %s78
      %s93 = sphi 0, %s79
      %s97 = sphi 0, %s97
      %s99 = sphi 0, %s97
      %s100 = sphi 0, %s99
      %s114 = sphi 0, %s100
      %s118 = sphi 0, %s118
      %s120 = sphi 0, %s118
      %s121 = sphi 0, %s120
      %s135 = sphi 0, %s121
      %s139 = sphi 0, %s139
      %s141 = sphi 0, %s139
      %s142 = sphi 0, %s141
      %s156 = sphi 0, %s142
      %s160 = sphi 0, %s160
      %s162 = sphi 0, %s160
      %s163 = sphi 0, %s162
      %s177 = sphi 0, %s163
      %s183 = sphi 0, %s185
      %s186 = sphi 0, %s183
      %s187 = sphi 0, %s186
      %s203 = sphi 0, %s187
    $region4: #{tpu_custom_call.1} parent=1 // loop_header_branch
      %24 = sbr.rel (%p22) target = $region8
    $region5: #{tpu_custom_call.1} parent=1 // loop_body
      %s26 = ssub.s32 %s21, 1
      %s27 = ssub.s32 %s21, 2
      %s28 = sadd.s32 %s21, 1
      %s29 = ssub.s32 %s21, %s28
      %p30 = scmp.eq.s32.totalorder %s29, 0
      %s32 = sadd.s32 %s31, 1
      %s33 = scalar_select %p30, %s31, %s32
      %p36 = pneg %p30
      %p37 = scmp.eq.s32.totalorder %s21, 1
      %p38 = por %p36, %p37
      %p39 = scmp.ne.s32.totalorder %s31, %s34
      %p40 = scmp.eq.s32.totalorder %s21, 0
      %p41 = por %p39, %p40
      %p42 = scmp.ne.s32.totalorder %s31, %s34
      %p43 = scmp.eq.s32.totalorder %s26, 1
      %p44 = por %p42, %p43
      %p45 = scmp.ne.s32.totalorder %s34, %s35
      %p46 = scmp.eq.s32.totalorder %s26, 0
      %p47 = por %p45, %p46
      %p48 = scmp.ne.s32.totalorder %s34, %s35
      %p49 = scmp.eq.s32.totalorder %s27, 1
      %p50 = por %p48, %p49
      %p52 = scmp.ne.s32.totalorder %s35, %s51
      %p53 = scmp.eq.s32.totalorder %s27, 0
      %p54 = por %p52, %p53
      %s56 = sadd.s32 %s55, 1
      %p59 = scmp.eq.s32.totalorder %s21, 1
      %p60 = scmp.ne.s32.totalorder %s55, %s57
      %p61 = scmp.eq.s32.totalorder %s21, 0
      %p62 = por %p60, %p61
      %p63 = scmp.ne.s32.totalorder %s55, %s57
      %p64 = scmp.eq.s32.totalorder %s26, 1
      %p65 = por %p63, %p64
      %p66 = scmp.ne.s32.totalorder %s57, %s58
      %p67 = scmp.eq.s32.totalorder %s26, 0
      %p68 = por %p66, %p67
      %p69 = scmp.ne.s32.totalorder %s57, %s58
      %p70 = scmp.eq.s32.totalorder %s27, 1
      %p71 = por %p69, %p70
      %p73 = scmp.ne.s32.totalorder %s58, %s72
      %p74 = scmp.eq.s32.totalorder %s27, 0
      %p75 = por %p73, %p74
      %s77 = sadd.s32 %s76, 1
      %p80 = scmp.eq.s32.totalorder %s21, 1
      %p81 = scmp.ne.s32.totalorder %s76, %s78
      %p82 = scmp.eq.s32.totalorder %s21, 0
      %p83 = por %p81, %p82
      %p84 = scmp.ne.s32.totalorder %s76, %s78
      %p85 = scmp.eq.s32.totalorder %s26, 1
      %p86 = por %p84, %p85
      %p87 = scmp.ne.s32.totalorder %s78, %s79
      %p88 = scmp.eq.s32.totalorder %s26, 0
      %p89 = por %p87, %p88
      %p90 = scmp.ne.s32.totalorder %s78, %s79
      %p91 = scmp.eq.s32.totalorder %s27, 1
      %p92 = por %p90, %p91
      %p94 = scmp.ne.s32.totalorder %s79, %s93
      %p95 = scmp.eq.s32.totalorder %s27, 0
      %p96 = por %p94, %p95
      %s98 = sadd.s32 %s97, 1
      %p101 = scmp.eq.s32.totalorder %s21, 1
      %p102 = scmp.ne.s32.totalorder %s97, %s99
      %p103 = scmp.eq.s32.totalorder %s21, 0
      %p104 = por %p102, %p103
      %p105 = scmp.ne.s32.totalorder %s97, %s99
      %p106 = scmp.eq.s32.totalorder %s26, 1
      %p107 = por %p105, %p106
      %p108 = scmp.ne.s32.totalorder %s99, %s100
      %p109 = scmp.eq.s32.totalorder %s26, 0
      %p110 = por %p108, %p109
      %p111 = scmp.ne.s32.totalorder %s99, %s100
      %p112 = scmp.eq.s32.totalorder %s27, 1
      %p113 = por %p111, %p112
      %p115 = scmp.ne.s32.totalorder %s100, %s114
      %p116 = scmp.eq.s32.totalorder %s27, 0
      %p117 = por %p115, %p116
      %s119 = sadd.s32 %s118, 1
      %p122 = scmp.eq.s32.totalorder %s21, 1
      %p123 = scmp.ne.s32.totalorder %s118, %s120
      %p124 = scmp.eq.s32.totalorder %s21, 0
      %p125 = por %p123, %p124
      %p126 = scmp.ne.s32.totalorder %s118, %s120
      %p127 = scmp.eq.s32.totalorder %s26, 1
      %p128 = por %p126, %p127
      %p129 = scmp.ne.s32.totalorder %s120, %s121
      %p130 = scmp.eq.s32.totalorder %s26, 0
      %p131 = por %p129, %p130
      %p132 = scmp.ne.s32.totalorder %s120, %s121
      %p133 = scmp.eq.s32.totalorder %s27, 1
      %p134 = por %p132, %p133
      %p136 = scmp.ne.s32.totalorder %s121, %s135
      %p137 = scmp.eq.s32.totalorder %s27, 0
      %p138 = por %p136, %p137
      %s140 = sadd.s32 %s139, 1
      %p143 = scmp.eq.s32.totalorder %s21, 1
      %p144 = scmp.ne.s32.totalorder %s139, %s141
      %p145 = scmp.eq.s32.totalorder %s21, 0
      %p146 = por %p144, %p145
      %p147 = scmp.ne.s32.totalorder %s139, %s141
      %p148 = scmp.eq.s32.totalorder %s26, 1
      %p149 = por %p147, %p148
      %p150 = scmp.ne.s32.totalorder %s141, %s142
      %p151 = scmp.eq.s32.totalorder %s26, 0
      %p152 = por %p150, %p151
      %p153 = scmp.ne.s32.totalorder %s141, %s142
      %p154 = scmp.eq.s32.totalorder %s27, 1
      %p155 = por %p153, %p154
      %p157 = scmp.ne.s32.totalorder %s142, %s156
      %p158 = scmp.eq.s32.totalorder %s27, 0
      %p159 = por %p157, %p158
      %s161 = sadd.s32 %s160, 1
      %p164 = scmp.eq.s32.totalorder %s21, 1
      %p165 = scmp.ne.s32.totalorder %s160, %s162
      %p166 = scmp.eq.s32.totalorder %s21, 0
      %p167 = por %p165, %p166
      %p168 = scmp.ne.s32.totalorder %s160, %s162
      %p169 = scmp.eq.s32.totalorder %s26, 1
      %p170 = por %p168, %p169
      %p171 = scmp.ne.s32.totalorder %s162, %s163
      %p172 = scmp.eq.s32.totalorder %s26, 0
      %p173 = por %p171, %p172
      %p174 = scmp.ne.s32.totalorder %s162, %s163
      %p175 = scmp.eq.s32.totalorder %s27, 1
      %p176 = por %p174, %p175
      %p178 = scmp.ne.s32.totalorder %s163, %s177
      %p179 = scmp.eq.s32.totalorder %s27, 0
      %p180 = por %p178, %p179
      %s181 = ssub.s32 %s21, %s28
      %p182 = scmp.eq.s32.totalorder %s181, 0
      %s184 = sadd.s32 %s183, 1
      %s185 = scalar_select %p182, %s183, %s184
      %p188 = pneg %p182
      %p189 = scmp.eq.s32.totalorder %s21, 1
      %p190 = por %p188, %p189
      %p191 = scmp.ne.s32.totalorder %s183, %s186
      %p192 = scmp.eq.s32.totalorder %s21, 0
      %p193 = por %p191, %p192
      %p194 = scmp.ne.s32.totalorder %s183, %s186
      %p195 = scmp.eq.s32.totalorder %s26, 1
      %p196 = por %p194, %p195
      %p197 = scmp.ne.s32.totalorder %s186, %s187
      %p198 = scmp.eq.s32.totalorder %s26, 0
      %p199 = por %p197, %p198
      %p200 = scmp.ne.s32.totalorder %s186, %s187
      %p201 = scmp.eq.s32.totalorder %s27, 1
      %p202 = por %p200, %p201
      %p204 = scmp.ne.s32.totalorder %s187, %s203
      %p205 = scmp.eq.s32.totalorder %s27, 0
      %p206 = por %p204, %p205
      %p207 = scmp.le.s32.totalorder 1, %s21
      %p208 = scmp.lt.s32.totalorder %s21, 3
      %p209 = pnand %p207, %p208
      %p210 = pneg %p209
      // Predicated region
      $region9: #{tpu_custom_call.1} parent=5 // pred_check
        _
      $region10: #{tpu_custom_call.1} parent=5 // pred_check_branch
        %212 = sbr.rel (%p209) target = $region12
      $region11: #{tpu_custom_call.1} parent=5 // pred_region
        %s213 = ssub.s32 %s21, 1
        // Predicated region
        $region13: #{tpu_custom_call.1} parent=11 // pred_check
          %p214 = pneg %p68
        $region14: #{tpu_custom_call.1} parent=11 // pred_check_branch
          %216 = sbr.rel (%p214) target = $region16
        $region15: #{tpu_custom_call.1} parent=11 // pred_region
          %218 = vsyncadd [#allocation6], 0
          %s219 = sshll.u32 %s1, 4
          %s220 = int_to_ptr.hbm [resolvable:$true] %s219
          %s221 = sshll.u32 [#allocation5], 4
          %s222 = int_to_ptr.vmem [resolvable:$true] %s221
          %227 = dma.hbm_to_vmem [thread:$0]  %s220, 1024, %s222, [#allocation6], 64, 64, 4
        $region16: #{tpu_custom_call.1} parent=11 // pred_fallthru
          _
        // Predicated region
        $region17: #{tpu_custom_call.1} parent=11 // pred_check
          %p228 = pneg %p89
        $region18: #{tpu_custom_call.1} parent=11 // pred_check_branch
          %230 = sbr.rel (%p228) target = $region20
        $region19: #{tpu_custom_call.1} parent=11 // pred_region
          _
        $region20: #{tpu_custom_call.1} parent=11 // pred_fallthru
          _
        // Predicated region
        $region21: #{tpu_custom_call.1} parent=11 // pred_check
          %p231 = pneg %p110
        $region22: #{tpu_custom_call.1} parent=11 // pred_check_branch
          %233 = sbr.rel (%p231) target = $region24
        $region23: #{tpu_custom_call.1} parent=11 // pred_region
          %235 = vsyncadd [#allocation6], 0
          %s236 = sshll.u32 %s3, 4
          %s237 = int_to_ptr.hbm [resolvable:$true] %s236
          %s238 = sshll.u32 [#allocation7], 4
          %s239 = int_to_ptr.vmem [resolvable:$true] %s238
          %244 = dma.hbm_to_vmem [thread:$0]  %s237, 1024, %s239, [#allocation6], 64, 64, 4
        $region24: #{tpu_custom_call.1} parent=11 // pred_fallthru
          _
        // Predicated region
        $region25: #{tpu_custom_call.1} parent=11 // pred_check
          %p245 = pneg %p131
        $region26: #{tpu_custom_call.1} parent=11 // pred_check_branch
          %247 = sbr.rel (%p245) target = $region28
        $region27: #{tpu_custom_call.1} parent=11 // pred_region
          _
        $region28: #{tpu_custom_call.1} parent=11 // pred_fallthru
          _
        // Predicated region
        $region29: #{tpu_custom_call.1} parent=11 // pred_check
          %p248 = pneg %p152
        $region30: #{tpu_custom_call.1} parent=11 // pred_check_branch
          %250 = sbr.rel (%p248) target = $region32
        $region31: #{tpu_custom_call.1} parent=11 // pred_region
          %252 = vsyncadd [#allocation9], 0
          %s253 = sshll.u32 %s5, 4
          %s254 = int_to_ptr.hbm [resolvable:$true] %s253
          %s255 = sshll.u32 [#allocation8], 4
          %s256 = int_to_ptr.vmem [resolvable:$true] %s255
          %261 = dma.hbm_to_vmem [thread:$0]  %s254, 1024, %s256, [#allocation9], 64, 64, 4
        $region32: #{tpu_custom_call.1} parent=11 // pred_fallthru
          _
        // Predicated region
        $region33: #{tpu_custom_call.1} parent=11 // pred_check
          %p262 = pneg %p173
        $region34: #{tpu_custom_call.1} parent=11 // pred_check_branch
          %264 = sbr.rel (%p262) target = $region36
        $region35: #{tpu_custom_call.1} parent=11 // pred_region
          _
        $region36: #{tpu_custom_call.1} parent=11 // pred_fallthru
          _
      $region12: #{tpu_custom_call.1} parent=5 // pred_fallthru
        _
      %p265 = scmp.lt.s32.totalorder %s21, 2
      // Predicated region
      $region37: #{tpu_custom_call.1} parent=5 // pred_check
        %p266 = pneg %p265
      $region38: #{tpu_custom_call.1} parent=5 // pred_check_branch
        %268 = sbr.rel (%p266) target = $region40
      $region39: #{tpu_custom_call.1} parent=5 // pred_region
        // Predicated region
        $region41: #{tpu_custom_call.1} parent=39 // pred_check
          %p269 = pneg %p41
        $region42: #{tpu_custom_call.1} parent=39 // pred_check_branch
          %271 = sbr.rel (%p269) target = $region44
        $region43: #{tpu_custom_call.1} parent=39 // pred_region
          %s272 = sand.u32 %s31, 1
          %s273 = scalar_lea.sflag [#allocation3], %s272
          %s274 = sand.u32 %s31, 1
          %s275 = smul.addr %s274, 32
          %s276 = scalar_lea.vmem [#allocation2], %s275
          %s277 = smul.u32 4, %s21
          %279 = vsyncadd %s273, 0
          %s280 = smul.addr %s277, 8
          %s281 = scalar_lea.hbm %s0, %s280
          %s282 = sshll.u32 %s281, 4
          %s283 = int_to_ptr.hbm [resolvable:$true] %s282
          %s284 = sshll.u32 %s276, 4
          %s285 = int_to_ptr.vmem [resolvable:$true] %s284
          %290 = dma.hbm_to_vmem [thread:$0]  %s283, 512, %s285, %s273, 128, 128, 8
        $region44: #{tpu_custom_call.1} parent=39 // pred_fallthru
          _
      $region40: #{tpu_custom_call.1} parent=5 // pred_fallthru
        _
      %p291 = scmp.le.s32.totalorder 1, %s21
      %p292 = scmp.lt.s32.totalorder %s21, 3
      %p293 = pnand %p291, %p292
      %p294 = pneg %p293
      // Predicated region
      $region45: #{tpu_custom_call.1} parent=5 // pred_check
        _
      $region46: #{tpu_custom_call.1} parent=5 // pred_check_branch
        %296 = sbr.rel (%p293) target = $region48
      $region47: #{tpu_custom_call.1} parent=5 // pred_region
        %s297 = ssub.s32 %s21, 1
        %s298 = sand.u32 %s34, 1
        %s299 = scalar_lea.sflag [#allocation3], %s298
        %s300 = sand.u32 %s34, 1
        %s301 = smul.addr %s300, 32
        %s302 = scalar_lea.vmem [#allocation2], %s301
        // Predicated region
        $region49: #{tpu_custom_call.1} parent=47 // pred_check
          %p303 = pneg %p47
        $region50: #{tpu_custom_call.1} parent=47 // pred_check_branch
          %305 = sbr.rel (%p303) target = $region52
        $region51: #{tpu_custom_call.1} parent=47 // pred_region
          %307 = dma.done %s299, 512
        $region52: #{tpu_custom_call.1} parent=47 // pred_fallthru
          _
        // Predicated region
        $region53: #{tpu_custom_call.1} parent=47 // pred_check
          %p308 = pneg %p68
        $region54: #{tpu_custom_call.1} parent=47 // pred_check_branch
          %310 = sbr.rel (%p308) target = $region56
        $region55: #{tpu_custom_call.1} parent=47 // pred_region
          %312 = dma.done [#allocation6], 1024
        $region56: #{tpu_custom_call.1} parent=47 // pred_fallthru
          _
        // Predicated region
        $region57: #{tpu_custom_call.1} parent=47 // pred_check
          %p313 = pneg %p110
        $region58: #{tpu_custom_call.1} parent=47 // pred_check_branch
          %315 = sbr.rel (%p313) target = $region60
        $region59: #{tpu_custom_call.1} parent=47 // pred_region
          %317 = dma.done [#allocation6], 1024
        $region60: #{tpu_custom_call.1} parent=47 // pred_fallthru
          _
        // Predicated region
        $region61: #{tpu_custom_call.1} parent=47 // pred_check
          %p318 = pneg %p152
        $region62: #{tpu_custom_call.1} parent=47 // pred_check_branch
          %320 = sbr.rel (%p318) target = $region64
        $region63: #{tpu_custom_call.1} parent=47 // pred_region
          %322 = dma.done [#allocation9], 1024
        $region64: #{tpu_custom_call.1} parent=47 // pred_fallthru
          _
        %s323 = sand.u32 %s34, 1
        %s324 = scalar_lea.sflag [#allocation3], %s323
        %s325 = sand.u32 %s34, 1
        %s326 = smul.addr %s325, 32
        %s327 = scalar_lea.vmem [#allocation2], %s326
        %p328 = pneg %p47
        %p329 = pneg %p44
        %p330 = pneg %p68
        %p331 = pneg %p65
        %p332 = pneg %p89
        %p333 = pneg %p86
        %p334 = pneg %p110
        %p335 = pneg %p107
        %p336 = pneg %p131
        %p337 = pneg %p128
        %p338 = pneg %p152
        %p339 = pneg %p149
        %p340 = pneg %p173
        %p341 = pneg %p170
        %p342 = pneg %p199
        %p343 = pneg %p196
        %s344 = sand.u32 %s186, 1
        %s345 = scalar_lea.sflag [#allocation4], %s344
        %s346 = sand.u32 %s186, 1
        %s347 = smul.addr %s346, 32
        %s348 = scalar_lea.vmem [#allocation10], %s347
        %s349 = smul.u32 4, %s26
        %s350 = smul.u32 4, %s26
        %v351 = vld [vmem:[%s302] sm:$0xff]
        %v352 = vld [vmem:[%s302 + $0x8] sm:$0xff]
        %v353 = vld [vmem:[%s302 + $0x10] sm:$0xff]
        %v354 = vld [vmem:[%s302 + $0x18] sm:$0xff]
        %v355 = vpack.c.bf16 %v352, %v351
        %v356 = vpack.c.bf16 %v354, %v353
        %v357 = vld [vmem:[#allocation5] sm:$0xf]
        %v358 = vld [vmem:[#allocation5 + $0x4] sm:$0xf]
        %v359 = vld [vmem:[#allocation5 + $0x8] sm:$0xf]
        %v360 = vld [vmem:[#allocation5 + $0xc] sm:$0xf]
        %v361 = vld [vmem:[#allocation5 + $0x10] sm:$0xf]
        %v362 = vld [vmem:[#allocation5 + $0x14] sm:$0xf]
        %v363 = vld [vmem:[#allocation5 + $0x18] sm:$0xf]
        %v364 = vld [vmem:[#allocation5 + $0x1c] sm:$0xf]
        %v365 = vld [vmem:[#allocation5 + $0x20] sm:$0xf]
        %v366 = vld [vmem:[#allocation5 + $0x24] sm:$0xf]
        %v367 = vld [vmem:[#allocation5 + $0x28] sm:$0xf]
        %v368 = vld [vmem:[#allocation5 + $0x2c] sm:$0xf]
        %v369 = vld [vmem:[#allocation5 + $0x30] sm:$0xf]
        %v370 = vld [vmem:[#allocation5 + $0x34] sm:$0xf]
        %v371 = vld [vmem:[#allocation5 + $0x38] sm:$0xf]
        %v372 = vld [vmem:[#allocation5 + $0x3c] sm:$0xf]
        %v373 = vld [vmem:[%s2] sm:$0x1]
        %v375 = vperm.slane %v373, 0
        %v393 = vunpack.c.l.b16 %v357
        %v394 = vunpack.c.l.b16 %v358
        %v395 = vunpack.c.l.b16 %v359
        %v396 = vunpack.c.l.b16 %v360
        %v397 = vunpack.c.l.b16 %v361
        %v398 = vunpack.c.l.b16 %v362
        %v399 = vunpack.c.l.b16 %v363
        %v400 = vunpack.c.l.b16 %v364
        %v401 = vunpack.c.l.b16 %v365
        %v402 = vunpack.c.l.b16 %v366
        %v403 = vunpack.c.l.b16 %v367
        %v404 = vunpack.c.l.b16 %v368
        %v405 = vunpack.c.l.b16 %v369
        %v406 = vunpack.c.l.b16 %v370
        %v407 = vunpack.c.l.b16 %v371
        %v408 = vunpack.c.l.b16 %v372
        %v409 = vpack.c.b16 %v394, %v393
        %v410 = vpack.c.b16 %v396, %v395
        %v411 = vpack.c.b16 %v398, %v397
        %v412 = vpack.c.b16 %v400, %v399
        %v413 = vpack.c.b16 %v402, %v401
        %v414 = vpack.c.b16 %v404, %v403
        %v415 = vpack.c.b16 %v406, %v405
        %v416 = vpack.c.b16 %v408, %v407
        %425 = vmatpush.bf16.msra.mxu0 %v416
        %426 = vmatpush.bf16.msra.mxu0 %v415
        %427 = vmatpush.bf16.msra.mxu0 %v414
        %428 = vmatpush.bf16.msra.mxu0 %v413
        %429 = vmatpush.bf16.msra.mxu0 %v412
        %430 = vmatpush.bf16.msra.mxu0 %v411
        %431 = vmatpush.bf16.msra.mxu0 %v410
        %432 = vmatpush.bf16.msra.mxu0 %v409
        %433 = vmatmul.bf16.gmra.mxu0 %v355
        %v434 = vpop.f32.mrf.mxu0
        %v435 = vadd.f32 %v375, %v434
        %v436 = vpop.f32.mrf.mxu0
        %v437 = vadd.f32 %v375, %v436
        %438 = vmatmul.bf16.gmra.mxu0 %v356
        %v439 = vpop.f32.mrf.mxu0
        %v440 = vadd.f32 %v375, %v439
        %v441 = vpop.f32.mrf.mxu0
        %v442 = vadd.f32 %v375, %v441
        %443 = vdwg.mxu0
        %v444 = vmax.f32 %v435, 0.0
        %v445 = vmax.f32 %v437, 0.0
        %v446 = vmax.f32 %v440, 0.0
        %v447 = vmax.f32 %v442, 0.0
        %v448 = vpack.c.bf16 %v445, %v444
        %v449 = vpack.c.bf16 %v447, %v446
        %v450 = vld [vmem:[#allocation7] sm:$0xf]
        %v451 = vld [vmem:[#allocation7 + $0x4] sm:$0xf]
        %v452 = vld [vmem:[#allocation7 + $0x8] sm:$0xf]
        %v453 = vld [vmem:[#allocation7 + $0xc] sm:$0xf]
        %v454 = vld [vmem:[#allocation7 + $0x10] sm:$0xf]
        %v455 = vld [vmem:[#allocation7 + $0x14] sm:$0xf]
        %v456 = vld [vmem:[#allocation7 + $0x18] sm:$0xf]
        %v457 = vld [vmem:[#allocation7 + $0x1c] sm:$0xf]
        %v458 = vld [vmem:[#allocation7 + $0x20] sm:$0xf]
        %v459 = vld [vmem:[#allocation7 + $0x24] sm:$0xf]
        %v460 = vld [vmem:[#allocation7 + $0x28] sm:$0xf]
        %v461 = vld [vmem:[#allocation7 + $0x2c] sm:$0xf]
        %v462 = vld [vmem:[#allocation7 + $0x30] sm:$0xf]
        %v463 = vld [vmem:[#allocation7 + $0x34] sm:$0xf]
        %v464 = vld [vmem:[#allocation7 + $0x38] sm:$0xf]
        %v465 = vld [vmem:[#allocation7 + $0x3c] sm:$0xf]
        %v466 = vld [vmem:[%s4] sm:$0x1]
        %v468 = vperm.slane %v466, 0
        %v486 = vunpack.c.l.b16 %v450
        %v487 = vunpack.c.l.b16 %v451
        %v488 = vunpack.c.l.b16 %v452
        %v489 = vunpack.c.l.b16 %v453
        %v490 = vunpack.c.l.b16 %v454
        %v491 = vunpack.c.l.b16 %v455
        %v492 = vunpack.c.l.b16 %v456
        %v493 = vunpack.c.l.b16 %v457
        %v494 = vunpack.c.l.b16 %v458
        %v495 = vunpack.c.l.b16 %v459
        %v496 = vunpack.c.l.b16 %v460
        %v497 = vunpack.c.l.b16 %v461
        %v498 = vunpack.c.l.b16 %v462
        %v499 = vunpack.c.l.b16 %v463
        %v500 = vunpack.c.l.b16 %v464
        %v501 = vunpack.c.l.b16 %v465
        %v502 = vpack.c.b16 %v487, %v486
        %v503 = vpack.c.b16 %v489, %v488
        %v504 = vpack.c.b16 %v491, %v490
        %v505 = vpack.c.b16 %v493, %v492
        %v506 = vpack.c.b16 %v495, %v494
        %v507 = vpack.c.b16 %v497, %v496
        %v508 = vpack.c.b16 %v499, %v498
        %v509 = vpack.c.b16 %v501, %v500
        %518 = vmatpush.bf16.msra.mxu0 %v509
        %519 = vmatpush.bf16.msra.mxu0 %v508
        %520 = vmatpush.bf16.msra.mxu0 %v507
        %521 = vmatpush.bf16.msra.mxu0 %v506
        %522 = vmatpush.bf16.msra.mxu0 %v505
        %523 = vmatpush.bf16.msra.mxu0 %v504
        %524 = vmatpush.bf16.msra.mxu0 %v503
        %525 = vmatpush.bf16.msra.mxu0 %v502
        %526 = vmatmul.bf16.gmra.mxu0 %v448
        %v527 = vpop.f32.mrf.mxu0
        %v528 = vadd.f32 %v468, %v527
        %v529 = vpop.f32.mrf.mxu0
        %v530 = vadd.f32 %v468, %v529
        %531 = vmatmul.bf16.gmra.mxu0 %v449
        %v532 = vpop.f32.mrf.mxu0
        %v533 = vadd.f32 %v468, %v532
        %v534 = vpop.f32.mrf.mxu0
        %v535 = vadd.f32 %v468, %v534
        %536 = vdwg.mxu0
        %v537 = vmax.f32 %v528, 0.0
        %v538 = vmax.f32 %v530, 0.0
        %v539 = vmax.f32 %v533, 0.0
        %v540 = vmax.f32 %v535, 0.0
        %v541 = vpack.c.bf16 %v538, %v537
        %v542 = vpack.c.bf16 %v540, %v539
        %v543 = vld [vmem:[#allocation8] sm:$0xf]
        %v544 = vld [vmem:[#allocation8 + $0x4] sm:$0xf]
        %v545 = vld [vmem:[#allocation8 + $0x8] sm:$0xf]
        %v546 = vld [vmem:[#allocation8 + $0xc] sm:$0xf]
        %v547 = vld [vmem:[#allocation8 + $0x10] sm:$0xf]
        %v548 = vld [vmem:[#allocation8 + $0x14] sm:$0xf]
        %v549 = vld [vmem:[#allocation8 + $0x18] sm:$0xf]
        %v550 = vld [vmem:[#allocation8 + $0x1c] sm:$0xf]
        %v551 = vld [vmem:[#allocation8 + $0x20] sm:$0xf]
        %v552 = vld [vmem:[#allocation8 + $0x24] sm:$0xf]
        %v553 = vld [vmem:[#allocation8 + $0x28] sm:$0xf]
        %v554 = vld [vmem:[#allocation8 + $0x2c] sm:$0xf]
        %v555 = vld [vmem:[#allocation8 + $0x30] sm:$0xf]
        %v556 = vld [vmem:[#allocation8 + $0x34] sm:$0xf]
        %v557 = vld [vmem:[#allocation8 + $0x38] sm:$0xf]
        %v558 = vld [vmem:[#allocation8 + $0x3c] sm:$0xf]
        %v559 = vld [vmem:[%s6] sm:$0x1]
        %v561 = vperm.slane %v559, 0
        %v579 = vunpack.c.l.b16 %v543
        %v580 = vunpack.c.l.b16 %v544
        %v581 = vunpack.c.l.b16 %v545
        %v582 = vunpack.c.l.b16 %v546
        %v583 = vunpack.c.l.b16 %v547
        %v584 = vunpack.c.l.b16 %v548
        %v585 = vunpack.c.l.b16 %v549
        %v586 = vunpack.c.l.b16 %v550
        %v587 = vunpack.c.l.b16 %v551
        %v588 = vunpack.c.l.b16 %v552
        %v589 = vunpack.c.l.b16 %v553
        %v590 = vunpack.c.l.b16 %v554
        %v591 = vunpack.c.l.b16 %v555
        %v592 = vunpack.c.l.b16 %v556
        %v593 = vunpack.c.l.b16 %v557
        %v594 = vunpack.c.l.b16 %v558
        %v595 = vpack.c.b16 %v580, %v579
        %v596 = vpack.c.b16 %v582, %v581
        %v597 = vpack.c.b16 %v584, %v583
        %v598 = vpack.c.b16 %v586, %v585
        %v599 = vpack.c.b16 %v588, %v587
        %v600 = vpack.c.b16 %v590, %v589
        %v601 = vpack.c.b16 %v592, %v591
        %v602 = vpack.c.b16 %v594, %v593
        %611 = vmatpush.bf16.msra.mxu0 %v602
        %612 = vmatpush.bf16.msra.mxu0 %v601
        %613 = vmatpush.bf16.msra.mxu0 %v600
        %614 = vmatpush.bf16.msra.mxu0 %v599
        %615 = vmatpush.bf16.msra.mxu0 %v598
        %616 = vmatpush.bf16.msra.mxu0 %v597
        %617 = vmatpush.bf16.msra.mxu0 %v596
        %618 = vmatpush.bf16.msra.mxu0 %v595
        %619 = vmatmul.bf16.gmra.mxu0 %v541
        %v620 = vpop.f32.mrf.mxu0
        %v621 = vadd.f32 %v561, %v620
        %v622 = vpop.f32.mrf.mxu0
        %v623 = vadd.f32 %v561, %v622
        %624 = vmatmul.bf16.gmra.mxu0 %v542
        %v625 = vpop.f32.mrf.mxu0
        %v626 = vadd.f32 %v561, %v625
        %v627 = vpop.f32.mrf.mxu0
        %v628 = vadd.f32 %v561, %v627
        %629 = vdwg.mxu0
        %v630 = vmax.f32 %v621, 0.0
        %v631 = vmax.f32 %v623, 0.0
        %v632 = vmax.f32 %v626, 0.0
        %v633 = vmax.f32 %v628, 0.0
        %634 = vst [vmem:[%s348] sm:$0xff] %v630
        %635 = vst [vmem:[%s348 + $0x8] sm:$0xff] %v631
        %636 = vst [vmem:[%s348 + $0x10] sm:$0xff] %v632
        %637 = vst [vmem:[%s348 + $0x18] sm:$0xff] %v633
        %s638 = sand.u32 %s186, 1
        %s639 = scalar_lea.sflag [#allocation4], %s638
        %s640 = sand.u32 %s186, 1
        %s641 = smul.addr %s640, 32
        %s642 = scalar_lea.vmem [#allocation10], %s641
        // Predicated region
        $region65: #{tpu_custom_call.1} parent=47 // pred_check
          %p643 = pneg %p196
        $region66: #{tpu_custom_call.1} parent=47 // pred_check_branch
          %645 = sbr.rel (%p643) target = $region68
        $region67: #{tpu_custom_call.1} parent=47 // pred_region
          %s646 = smul.u32 4, %s26
          %648 = vsyncadd %s639, 0
          %s649 = smul.addr %s646, 8
          %s650 = scalar_lea.hbm %s7, %s649
          %s651 = sshll.u32 %s642, 4
          %s652 = int_to_ptr.vmem [resolvable:$true] %s651
          %s653 = sshll.u32 %s650, 4
          %s654 = int_to_ptr.hbm [resolvable:$true] %s653
          %659 = dma.vmem_to_hbm [thread:$0]  %s652, 512, %s654, %s639, 128, 128, 8
        $region68: #{tpu_custom_call.1} parent=47 // pred_fallthru
          _
      $region48: #{tpu_custom_call.1} parent=5 // pred_fallthru
        _
      %p660 = scmp.le.s32.totalorder 2, %s21
      // Predicated region
      $region69: #{tpu_custom_call.1} parent=5 // pred_check
        %p661 = pneg %p660
      $region70: #{tpu_custom_call.1} parent=5 // pred_check_branch
        %663 = sbr.rel (%p661) target = $region72
      $region71: #{tpu_custom_call.1} parent=5 // pred_region
        %s664 = ssub.s32 %s21, 2
        // Predicated region
        $region73: #{tpu_custom_call.1} parent=71 // pred_check
          %p665 = pneg %p202
        $region74: #{tpu_custom_call.1} parent=71 // pred_check_branch
          %667 = sbr.rel (%p665) target = $region76
        $region75: #{tpu_custom_call.1} parent=71 // pred_region
          %s668 = sand.u32 %s187, 1
          %s669 = scalar_lea.sflag [#allocation4], %s668
          %s670 = sand.u32 %s187, 1
          %s671 = smul.addr %s670, 32
          %s672 = scalar_lea.vmem [#allocation10], %s671
          %674 = dma.done %s669, 512
        $region76: #{tpu_custom_call.1} parent=71 // pred_fallthru
          _
      $region72: #{tpu_custom_call.1} parent=5 // pred_fallthru
        _
    $region6: #{tpu_custom_call.1} parent=1 // loop_footer
      %s25 = sadd.s32 1, %s21
    $region7: #{tpu_custom_call.1} parent=1 // loop_footer_branch
      %20 = sbr.rel target = $region3
    $region8: #{tpu_custom_call.1} parent=1 // loop_exit
      _
    %675 = vsyncpa [#allocation3], 1
    %s676 = scalar_lea.sflag [#allocation3], 1
    %677 = vsyncpa %s676, 1
    %678 = vsyncpa [#allocation6], 1
    %679 = vsyncpa [#allocation9], 1
    %680 = vsyncpa [#allocation4], 1
    %s681 = scalar_lea.sflag [#allocation4], 1
    %682 = vsyncpa %s681, 1

</llo_original>
